<compile_context>
chip_gen: v7x
topology: tpu7x:2x2x1
jax: 0.10.0
libtpu: 0.0.40
codegen_flags: <defaults>
</compile_context>

<pallas_src>
import math

import jax
import jax.numpy as jnp
from jax.experimental import pallas as pl
from jax.experimental.pallas import tpu as pltpu

# ---- hyperparameters (BTCTransformer defaults) ----
INPUT_DIM = 7
IN_PAD = 8                    # input features zero-padded to 8
D_MODEL = 32
NHEAD = 4
HEAD_DIM = D_MODEL // NHEAD
DFF = D_MODEL * 4
ACTION_DIM = 3
LN_EPS = 1e-5                 # PyTorch nn.LayerNorm default

# ---- batch packing: 4 batch elements per row (lane-dense token path) ----
PK = 4
PIN = PK * IN_PAD             # 32
PD = PK * D_MODEL             # 128
PKV = PK * 2 * D_MODEL        # 256   packed fused K|V width
PH = PK * NHEAD               # 16    packed per-head score width
PFF = PK * DFF                # 512
POUT = PK * 128               # 512   packed fused head output width

# ---- 128-lane weight slab (wa) row offsets ----
OFF_WIN = 0                   # (PIN, PD)   block-diag input projection
OFF_M = 32                    # (PD, PD)    block-diag mean matrix (1/32 blocks)
OFF_WO = 160                  # (PKV, PD)   block-diag attn out-projection (V slots)
OFF_W2 = 416                  # (PFF, PD)   block-diag FF down-projection
OFF_PE = 928                  # (TBG*S, PD) positional encoding, lane+row tiled
# ---- 256-lane weight slab (wb) row offsets ----
OFF_WKV = 0                   # (PD, PKV)   block-diag fused K|V projection
OFF_WQ = 128                  # (PD, PKV)   block-diag Q projection (scale folded)
OFF_HSEL = 256                # (PKV, PH)   qk -> per-head score selector
OFF_HSELV = 512               # (PH, PKV)   prob -> V-lane expander
RB_ROWS = 528
# ---- 512-lane weight slab (wc) row offsets ----
OFF_W1 = 0                    # (PD, PFF)   block-diag FF up-projection
OFF_WHD = 128                 # (PD, POUT)  block-diag fused action/value heads
OFF_VEC = 256                 # 16 bias / gamma / beta / PE rows
RC_ROWS = 272

(V_BIN, V_G0, V_BE0, V_PELAST, V_BKV, V_BQ, V_BO, V_G1, V_BE1,
 V_B1, V_B2, V_G2, V_BE2, V_GF, V_BEF, V_BHD) = range(16)


def _round8(n):
    return (n + 7) // 8 * 8


def _erf(z):
    # Abramowitz & Stegun 7.1.26 rational approximation (max abs err ~1.5e-7).
    a1, a2, a3, a4, a5 = 0.254829592, -0.284496736, 1.421413741, -1.453152027, 1.061405429
    p = 0.3275911
    x = jnp.abs(z)
    t = 1.0 / (1.0 + p * x)
    poly = ((((a5 * t + a4) * t + a3) * t + a2) * t + a1) * t
    y = 1.0 - poly * jnp.exp(-x * x)
    return jnp.where(z >= 0.0, y, -y)


def _gelu(v):
    # exact-GELU semantics: 0.5 * v * (1 + erf(v / sqrt(2)))
    return 0.5 * v * (1.0 + _erf(v * (1.0 / math.sqrt(2.0))))


def btc_transformer_kernel(x_ref, xlast_ref, wa_ref, wb_ref, wc_ref, out_ref):
    f32 = jnp.float32
    TBG = xlast_ref.shape[0]          # packed batch groups per grid step
    ROWS = x_ref.shape[0]             # TBG * S token rows
    S = ROWS // TBG

    def wa(off, rows, cols=PD):
        return wa_ref[off:off + rows, 0:cols]

    def wb(off, rows, cols):
        return wb_ref[off:off + rows, 0:cols]

    def vrow(idx, cols=PD):
        r = OFF_VEC + idx
        return wc_ref[r:r + 1, 0:cols]                     # (1, cols)

    mean_mat = wa(OFF_M, PD)                               # (128, 128) block-diag 1/32

    def layernorm(z, g_idx, b_idx):
        # per-element (32-lane group) LayerNorm with centered variance.
        mu = jnp.dot(z, mean_mat, preferred_element_type=f32)
        d = z - mu
        var = jnp.dot(d * d, mean_mat, preferred_element_type=f32)
        return d * jax.lax.rsqrt(var + LN_EPS) * vrow(g_idx) + vrow(b_idx)

    win = wa(OFF_WIN, PIN)                                 # (32, 128)

    # ---- full-sequence path: input_proj -> LN -> ReLU -> Dropout(id) -> +PE -> K|V ----
    h = jnp.dot(x_ref[...], win, preferred_element_type=f32) + vrow(V_BIN)
    h = layernorm(h, V_G0, V_BE0)
    h = jnp.maximum(h, 0.0)
    h = h + wa(OFF_PE, ROWS)                               # pre-tiled positional encoding

    kv = jnp.dot(h, wb(OFF_WKV, PD, PKV), preferred_element_type=f32) + vrow(V_BKV, PKV)
    kv3 = kv.reshape(TBG, S, PKV)

    # ---- last-token row recompute (TBG packed rows only) ----
    hl = jnp.dot(xlast_ref[...], win, preferred_element_type=f32) + vrow(V_BIN)
    hl = layernorm(hl, V_G0, V_BE0)
    hl = jnp.maximum(hl, 0.0) + vrow(V_PELAST)

    # ---- self-attention, last query row only (causal mask never hits it) ----
    q = jnp.dot(hl, wb(OFF_WQ, PD, PKV), preferred_element_type=f32) + vrow(V_BQ, PKV)
    qk = (kv3 * q[:, None, :]).reshape(ROWS, PKV)
    scores = jnp.dot(qk, wb(OFF_HSEL, PKV, PH),
                     preferred_element_type=f32).reshape(TBG, S, PH)
    mx = jnp.max(scores, axis=1, keepdims=True)
    e = jnp.exp(scores - mx)
    den = jnp.sum(e, axis=1, keepdims=True)
    p = (e / den).reshape(ROWS, PH)                        # exact softmax probs
    p_exp = jnp.dot(p, wb(OFF_HSELV, PH, PKV), preferred_element_type=f32)
    attn_pre = jnp.sum((p_exp * kv).reshape(TBG, S, PKV), axis=1)      # (TBG, 256)
    attn = jnp.dot(attn_pre, wa(OFF_WO, PKV), preferred_element_type=f32) + vrow(V_BO)

    # ---- post-norm encoder layer + encoder final norm (packed, TBG rows) ----
    y = layernorm(hl + attn, V_G1, V_BE1)                  # norm1(x + attn)
    ff = jnp.dot(y, wc_ref[OFF_W1:OFF_W1 + PD, :],
                 preferred_element_type=f32) + vrow(V_B1, PFF)
    ff = _gelu(ff)
    ff = jnp.dot(ff, wa(OFF_W2, PFF), preferred_element_type=f32) + vrow(V_B2)
    y = layernorm(y + ff, V_G2, V_BE2)                     # norm2(x + ff)
    y = layernorm(y, V_GF, V_BEF)                          # TransformerEncoder final norm

    # ---- fused heads: per element lanes 0..2 = action logits, lane 3 = value ----
    out = jnp.dot(y, wc_ref[OFF_WHD:OFF_WHD + PD, :],
                  preferred_element_type=f32) + vrow(V_BHD, POUT)
    out_ref[...] = out.astype(out_ref.dtype)


# -------------------- plain-JAX glue --------------------

def make_positional_encoding(seq_len, d_model):
    position = jnp.arange(seq_len, dtype=jnp.float32)[:, None]
    div_term = jnp.exp(jnp.arange(0, d_model, 2, dtype=jnp.float32)
                       * (-math.log(10000.0) / d_model))
    pe = jnp.zeros((seq_len, d_model), dtype=jnp.float32)
    pe = pe.at[:, 0::2].set(jnp.sin(position * div_term))
    pe = pe.at[:, 1::2].set(jnp.cos(position * div_term))
    return pe


def init_params(key):
    """Deterministic synthetic parameters (PyTorch Linear convention: W is (out, in))."""
    def lin(k, out_dim, in_dim, scale=0.05):
        kw, kb = jax.random.split(k)
        w = scale * jax.random.normal(kw, (out_dim, in_dim), jnp.float32)
        b = scale * jax.random.normal(kb, (out_dim,), jnp.float32)
        return w, b

    keys = jax.random.split(key, 7)
    p = {}
    p['w_in'], p['b_in'] = lin(keys[0], D_MODEL, INPUT_DIM)
    p['g0'], p['be0'] = jnp.ones((D_MODEL,)), jnp.zeros((D_MODEL,))
    p['wqkv'], p['bqkv'] = lin(keys[1], 3 * D_MODEL, D_MODEL)
    p['wo'], p['bo'] = lin(keys[2], D_MODEL, D_MODEL)
    p['g1'], p['be1'] = jnp.ones((D_MODEL,)), jnp.zeros((D_MODEL,))
    p['wff1'], p['bff1'] = lin(keys[3], DFF, D_MODEL)
    p['wff2'], p['bff2'] = lin(keys[4], D_MODEL, DFF)
    p['g2'], p['be2'] = jnp.ones((D_MODEL,)), jnp.zeros((D_MODEL,))
    p['gf'], p['bef'] = jnp.ones((D_MODEL,)), jnp.zeros((D_MODEL,))
    p['wa'], p['ba'] = lin(keys[5], ACTION_DIM, D_MODEL)
    p['wvh'], p['bvh'] = lin(keys[6], 1, D_MODEL)
    return p


def _kron4(block):
    return jnp.kron(jnp.eye(PK, dtype=jnp.float32), block.astype(jnp.float32))


def _pack_operands(params, S, TBG):
    """Build the three lane-width-grouped parameter slabs (block-diag packed)."""
    scale = 1.0 / math.sqrt(HEAD_DIM)
    wqkv, bqkv = params['wqkv'], params['bqkv']
    wq_t = wqkv[0:D_MODEL].T * scale                       # scale folded into q
    wk_t = wqkv[D_MODEL:2 * D_MODEL].T
    wv_t = wqkv[2 * D_MODEL:3 * D_MODEL].T
    bq = bqkv[0:D_MODEL] * scale
    bk = bqkv[D_MODEL:2 * D_MODEL]
    bv = bqkv[2 * D_MODEL:3 * D_MODEL]
    pe = make_positional_encoding(S, D_MODEL)

    # ---- 128-lane slab ----
    win_pad = jnp.zeros((IN_PAD, D_MODEL), jnp.float32).at[:INPUT_DIM, :].set(params['w_in'].T)
    win_blk = _kron4(win_pad)                                              # (32, 128)
    m_blk = _kron4(jnp.full((D_MODEL, D_MODEL), 1.0 / D_MODEL, jnp.float32))  # (128, 128)
    wo_blk = _kron4(jnp.concatenate(
        [jnp.zeros((D_MODEL, D_MODEL), jnp.float32), params['wo'].T], axis=0))  # (256, 128)
    w2_blk = _kron4(params['wff2'].T)                                      # (512, 128)
    pe_tiled = jnp.tile(jnp.tile(pe, (1, PK)), (TBG, 1))                   # (TBG*S, 128)

    ra_rows = OFF_PE + _round8(TBG * S)
    wa = jnp.zeros((ra_rows, 128), jnp.float32)
    wa = wa.at[OFF_WIN:OFF_WIN + PIN].set(win_blk)
    wa = wa.at[OFF_M:OFF_M + PD].set(m_blk)
    wa = wa.at[OFF_WO:OFF_WO + PKV].set(wo_blk)
    wa = wa.at[OFF_W2:OFF_W2 + PFF].set(w2_blk)
    wa = wa.at[OFF_PE:OFF_PE + TBG * S].set(pe_tiled)

    # ---- 256-lane slab ----
    wkv_blk = _kron4(jnp.concatenate([wk_t, wv_t], axis=1))                # (128, 256)
    wq_blk = _kron4(jnp.concatenate(
        [wq_t, jnp.zeros((D_MODEL, D_MODEL), jnp.float32)], axis=1))       # (128, 256)
    head_of_dim = jnp.arange(D_MODEL)[:, None] // HEAD_DIM                 # (32, 1)
    sel_kd = (head_of_dim == jnp.arange(NHEAD)[None, :]).astype(jnp.float32)   # (32, 4)
    hsel_blk = _kron4(jnp.zeros((2 * D_MODEL, NHEAD), jnp.float32).at[:D_MODEL, :].set(sel_kd))
    hselv_blk = _kron4(jnp.zeros((NHEAD, 2 * D_MODEL), jnp.float32).at[:, D_MODEL:].set(sel_kd.T))

    wb = jnp.zeros((RB_ROWS, 256), jnp.float32)
    wb = wb.at[OFF_WKV:OFF_WKV + PD, :].set(wkv_blk)
    wb = wb.at[OFF_WQ:OFF_WQ + PD, :].set(wq_blk)
    wb = wb.at[OFF_HSEL:OFF_HSEL + PKV, :PH].set(hsel_blk)
    wb = wb.at[OFF_HSELV:OFF_HSELV + PH, :].set(hselv_blk)

    # ---- 512-lane slab (big weights + all bias/gamma/beta/PE-last rows) ----
    w1_blk = _kron4(params['wff1'].T)                                      # (128, 512)
    whd_base = jnp.zeros((D_MODEL, 128), jnp.float32)
    whd_base = whd_base.at[:, :ACTION_DIM].set(params['wa'].T)
    whd_base = whd_base.at[:, ACTION_DIM:ACTION_DIM + 1].set(params['wvh'].T)
    whd_blk = _kron4(whd_base)                                             # (128, 512)

    wc = jnp.zeros((RC_ROWS, 512), jnp.float32)
    wc = wc.at[OFF_W1:OFF_W1 + PD].set(w1_blk)
    wc = wc.at[OFF_WHD:OFF_WHD + PD].set(whd_blk)

    def tile_vec(v):
        return jnp.tile(v.astype(jnp.float32), PK)

    def set_vec(slab, idx, vec):
        return slab.at[OFF_VEC + idx, :vec.shape[0]].set(vec)

    wc = set_vec(wc, V_BIN, tile_vec(params['b_in']))
    wc = set_vec(wc, V_G0, tile_vec(params['g0']))
    wc = set_vec(wc, V_BE0, tile_vec(params['be0']))
    wc = set_vec(wc, V_PELAST, tile_vec(pe[S - 1]))
    wc = set_vec(wc, V_BKV, tile_vec(jnp.concatenate([bk, bv])))
    wc = set_vec(wc, V_BQ, tile_vec(jnp.concatenate([bq, jnp.zeros((D_MODEL,), jnp.float32)])))
    wc = set_vec(wc, V_BO, tile_vec(params['bo']))
    wc = set_vec(wc, V_G1, tile_vec(params['g1']))
    wc = set_vec(wc, V_BE1, tile_vec(params['be1']))
    wc = set_vec(wc, V_B1, tile_vec(params['bff1']))
    wc = set_vec(wc, V_B2, tile_vec(params['bff2']))
    wc = set_vec(wc, V_G2, tile_vec(params['g2']))
    wc = set_vec(wc, V_BE2, tile_vec(params['be2']))
    wc = set_vec(wc, V_GF, tile_vec(params['gf']))
    wc = set_vec(wc, V_BEF, tile_vec(params['bef']))
    bhd = jnp.zeros((128,), jnp.float32).at[:ACTION_DIM].set(params['ba'])
    bhd = bhd.at[ACTION_DIM].set(params['bvh'][0])
    wc = set_vec(wc, V_BHD, tile_vec(bhd))
    return wa, wb, wc


def _plan_batch(B, S):
    """Pick (padded packed-group count G, groups per grid step TBG)."""
    G0 = -(-B // PK)                       # ceil(B / 4) packed groups
    cap = max(1, 512 // max(S, 1))         # keep token-path rows (TBG*S) ~<= 512
    if G0 <= 8 or (G0 <= cap and G0 < 16):
        return G0, G0                      # small problem: one full-extent grid step
    # multiple steps: sublane-aligned block rows, >= 2 steps (v7x megacore)
    tbg = max(8, (min(cap, max(1, G0 // 2)) // 8) * 8)
    G = -(-G0 // tbg) * tbg
    return G, tbg


@jax.jit
def btc_transformer_forward(x, params):
    B, S, _ = x.shape
    G, TBG = _plan_batch(B, S)
    B_pad = G * PK

    x = jnp.pad(x.astype(jnp.float32),
                ((0, B_pad - B), (0, 0), (0, IN_PAD - INPUT_DIM)))
    # batch packing: element 4g+j lives in lane group j of packed row (g, s)
    x_packed = x.reshape(G, PK, S, IN_PAD).transpose(0, 2, 1, 3).reshape(G * S, PIN)
    x_last = x[:, S - 1, :].reshape(G, PIN)
    wa, wb, wc = _pack_operands(params, S, TBG)

    out = pl.pallas_call(
        btc_transformer_kernel,
        grid=(G // TBG,),
        in_specs=[
            pl.BlockSpec((TBG * S, PIN), lambda i: (i, 0)),
            pl.BlockSpec((TBG, PIN), lambda i: (i, 0)),
            pl.BlockSpec(wa.shape, lambda i: (0, 0)),   # resident: fetched once
            pl.BlockSpec(wb.shape, lambda i: (0, 0)),
            pl.BlockSpec(wc.shape, lambda i: (0, 0)),
        ],
        out_specs=pl.BlockSpec((TBG, POUT), lambda i: (i, 0)),
        out_shape=jax.ShapeDtypeStruct((G, POUT), jnp.float32),
        compiler_params=pltpu.CompilerParams(
            dimension_semantics=("parallel",)),
    )(x_packed, x_last, wa, wb, wc)

    out = out.reshape(B_pad, 128)[:B]
    logits = out[:, :ACTION_DIM]
    value = out[:, ACTION_DIM]                             # value_head(...).squeeze(-1)
    return logits, value


if __name__ == "__main__":
    key = jax.random.PRNGKey(0)
    k_x, k_p = jax.random.split(key)

    B, S = 2, 8
    x = jax.random.normal(k_x, (B, S, INPUT_DIM), jnp.float32)
    params = init_params(k_p)

    logits, value = btc_transformer_forward(x, params)
    jax.block_until_ready((logits, value))

    assert logits.shape == (B, ACTION_DIM)
    assert value.shape == (B,)
    assert bool(jnp.all(jnp.isfinite(logits))) and bool(jnp.all(jnp.isfinite(value)))
    print("KERNEL_OK")
</pallas_src>

<mosaic_0001>
module attributes {stable_mosaic.version = 11 : i64} {
  func.func @btc_transformer_kernel(%arg0: i32, %arg1: memref<8x32xf32, #tpu.memory_space<vmem>>, %arg2: memref<1x32xf32, #tpu.memory_space<vmem>>, %arg3: memref<936x128xf32, #tpu.memory_space<vmem>>, %arg4: memref<528x256xf32, #tpu.memory_space<vmem>>, %arg5: memref<272x512xf32, #tpu.memory_space<vmem>>, %arg6: memref<1x512xf32, #tpu.memory_space<vmem>>) attributes {dimension_semantics = [#tpu.dimension_semantics<parallel>], iteration_bounds = array<i64: 1>, scalar_prefetch = 0 : i64, scratch_operands = 0 : i64, tpu.core_type = #tpu.core_type<tc>, window_params = [{transform_indices = @transform_0, window_bounds = array<i64: 8, 32>}, {transform_indices = @transform_1, window_bounds = array<i64: 1, 32>}, {pipeline_mode = #tpu.pipeline_mode<synchronous>, transform_indices = @transform_2, window_bounds = array<i64: 936, 128>}, {pipeline_mode = #tpu.pipeline_mode<synchronous>, transform_indices = @transform_3, window_bounds = array<i64: 528, 256>}, {pipeline_mode = #tpu.pipeline_mode<synchronous>, transform_indices = @transform_4, window_bounds = array<i64: 272, 512>}, {transform_indices = @transform_5, window_bounds = array<i64: 1, 512>}]} {
    %c32 = arith.constant 32 : index
    %c0 = arith.constant 0 : index
    %0 = vector.load %arg3[%c32, %c0] : memref<936x128xf32, #tpu.memory_space<vmem>>, vector<128x128xf32>
    %c0_0 = arith.constant 0 : index
    %c0_1 = arith.constant 0 : index
    %1 = vector.load %arg3[%c0_0, %c0_1] : memref<936x128xf32, #tpu.memory_space<vmem>>, vector<32x128xf32>
    %c0_2 = arith.constant 0 : index
    %c0_3 = arith.constant 0 : index
    %2 = vector.load %arg1[%c0_2, %c0_3] : memref<8x32xf32, #tpu.memory_space<vmem>>, vector<8x32xf32>
    %cst = arith.constant dense<0.000000e+00> : vector<8x128xf32>
    %3 = tpu.matmul %2, %1, %cst {dimension_numbers = #tpu.dot_dimension_numbers<[1], [0], [0], [1], [0, 0, 1, 1], [], []>} : vector<8x32xf32>, vector<32x128xf32>, vector<8x128xf32> -> vector<8x128xf32>
    %c256 = arith.constant 256 : index
    %c0_4 = arith.constant 0 : index
    %4 = vector.load %arg5[%c256, %c0_4] : memref<272x512xf32, #tpu.memory_space<vmem>>, vector<1x128xf32>
    %5 = vector.broadcast %4 : vector<1x128xf32> to vector<8x128xf32>
    %6 = arith.addf %3, %5 : vector<8x128xf32>
    %cst_5 = arith.constant dense<0.000000e+00> : vector<8x128xf32>
    %7 = tpu.matmul %6, %0, %cst_5 {dimension_numbers = #tpu.dot_dimension_numbers<[1], [0], [0], [1], [0, 0, 1, 1], [], []>} : vector<8x128xf32>, vector<128x128xf32>, vector<8x128xf32> -> vector<8x128xf32>
    %8 = arith.subf %6, %7 : vector<8x128xf32>
    %9 = arith.mulf %8, %8 : vector<8x128xf32>
    %cst_6 = arith.constant dense<0.000000e+00> : vector<8x128xf32>
    %10 = tpu.matmul %9, %0, %cst_6 {dimension_numbers = #tpu.dot_dimension_numbers<[1], [0], [0], [1], [0, 0, 1, 1], [], []>} : vector<8x128xf32>, vector<128x128xf32>, vector<8x128xf32> -> vector<8x128xf32>
    %cst_7 = arith.constant 9.99999974E-6 : f32
    %11 = vector.broadcast %cst_7 : f32 to vector<8x128xf32>
    %12 = arith.addf %10, %11 : vector<8x128xf32>
    %13 = math.rsqrt %12 : vector<8x128xf32>
    %14 = arith.mulf %8, %13 : vector<8x128xf32>
    %c257 = arith.constant 257 : index
    %c0_8 = arith.constant 0 : index
    %15 = vector.load %arg5[%c257, %c0_8] : memref<272x512xf32, #tpu.memory_space<vmem>>, vector<1x128xf32>
    %16 = vector.broadcast %15 : vector<1x128xf32> to vector<8x128xf32>
    %17 = arith.mulf %14, %16 : vector<8x128xf32>
    %c258 = arith.constant 258 : index
    %c0_9 = arith.constant 0 : index
    %18 = vector.load %arg5[%c258, %c0_9] : memref<272x512xf32, #tpu.memory_space<vmem>>, vector<1x128xf32>
    %19 = vector.broadcast %18 : vector<1x128xf32> to vector<8x128xf32>
    %20 = arith.addf %17, %19 : vector<8x128xf32>
    %cst_10 = arith.constant 0.000000e+00 : f32
    %21 = vector.broadcast %cst_10 : f32 to vector<8x128xf32>
    %22 = arith.maximumf %20, %21 : vector<8x128xf32>
    %c928 = arith.constant 928 : index
    %c0_11 = arith.constant 0 : index
    %23 = vector.load %arg3[%c928, %c0_11] : memref<936x128xf32, #tpu.memory_space<vmem>>, vector<8x128xf32>
    %24 = arith.addf %22, %23 : vector<8x128xf32>
    %c0_12 = arith.constant 0 : index
    %c0_13 = arith.constant 0 : index
    %25 = vector.load %arg4[%c0_12, %c0_13] : memref<528x256xf32, #tpu.memory_space<vmem>>, vector<128x256xf32>
    %cst_14 = arith.constant dense<0.000000e+00> : vector<8x256xf32>
    %26 = tpu.matmul %24, %25, %cst_14 {dimension_numbers = #tpu.dot_dimension_numbers<[1], [0], [0], [1], [0, 0, 1, 1], [], []>} : vector<8x128xf32>, vector<128x256xf32>, vector<8x256xf32> -> vector<8x256xf32>
    %c260 = arith.constant 260 : index
    %c0_15 = arith.constant 0 : index
    %27 = vector.load %arg5[%c260, %c0_15] : memref<272x512xf32, #tpu.memory_space<vmem>>, vector<1x256xf32>
    %28 = vector.broadcast %27 : vector<1x256xf32> to vector<8x256xf32>
    %29 = arith.addf %26, %28 : vector<8x256xf32>
    %30 = vector.shape_cast %29 : vector<8x256xf32> to vector<1x8x256xf32>
    %c0_16 = arith.constant 0 : index
    %c0_17 = arith.constant 0 : index
    %31 = vector.load %arg2[%c0_16, %c0_17] : memref<1x32xf32, #tpu.memory_space<vmem>>, vector<1x32xf32>
    %cst_18 = arith.constant dense<0.000000e+00> : vector<1x128xf32>
    %32 = tpu.matmul %31, %1, %cst_18 {dimension_numbers = #tpu.dot_dimension_numbers<[1], [0], [0], [1], [0, 0, 1, 1], [], []>} : vector<1x32xf32>, vector<32x128xf32>, vector<1x128xf32> -> vector<1x128xf32>
    %c256_19 = arith.constant 256 : index
    %c0_20 = arith.constant 0 : index
    %33 = vector.load %arg5[%c256_19, %c0_20] : memref<272x512xf32, #tpu.memory_space<vmem>>, vector<1x128xf32>
    %34 = arith.addf %32, %33 : vector<1x128xf32>
    %cst_21 = arith.constant dense<0.000000e+00> : vector<1x128xf32>
    %35 = tpu.matmul %34, %0, %cst_21 {dimension_numbers = #tpu.dot_dimension_numbers<[1], [0], [0], [1], [0, 0, 1, 1], [], []>} : vector<1x128xf32>, vector<128x128xf32>, vector<1x128xf32> -> vector<1x128xf32>
    %36 = arith.subf %34, %35 : vector<1x128xf32>
    %37 = arith.mulf %36, %36 : vector<1x128xf32>
    %cst_22 = arith.constant dense<0.000000e+00> : vector<1x128xf32>
    %38 = tpu.matmul %37, %0, %cst_22 {dimension_numbers = #tpu.dot_dimension_numbers<[1], [0], [0], [1], [0, 0, 1, 1], [], []>} : vector<1x128xf32>, vector<128x128xf32>, vector<1x128xf32> -> vector<1x128xf32>
    %cst_23 = arith.constant 9.99999974E-6 : f32
    %39 = vector.broadcast %cst_23 : f32 to vector<1x128xf32>
    %40 = arith.addf %38, %39 : vector<1x128xf32>
    %41 = math.rsqrt %40 : vector<1x128xf32>
    %42 = arith.mulf %36, %41 : vector<1x128xf32>
    %c257_24 = arith.constant 257 : index
    %c0_25 = arith.constant 0 : index
    %43 = vector.load %arg5[%c257_24, %c0_25] : memref<272x512xf32, #tpu.memory_space<vmem>>, vector<1x128xf32>
    %44 = arith.mulf %42, %43 : vector<1x128xf32>
    %c258_26 = arith.constant 258 : index
    %c0_27 = arith.constant 0 : index
    %45 = vector.load %arg5[%c258_26, %c0_27] : memref<272x512xf32, #tpu.memory_space<vmem>>, vector<1x128xf32>
    %46 = arith.addf %44, %45 : vector<1x128xf32>
    %cst_28 = arith.constant 0.000000e+00 : f32
    %47 = vector.broadcast %cst_28 : f32 to vector<1x128xf32>
    %48 = arith.maximumf %46, %47 : vector<1x128xf32>
    %c259 = arith.constant 259 : index
    %c0_29 = arith.constant 0 : index
    %49 = vector.load %arg5[%c259, %c0_29] : memref<272x512xf32, #tpu.memory_space<vmem>>, vector<1x128xf32>
    %50 = arith.addf %48, %49 : vector<1x128xf32>
    %c128 = arith.constant 128 : index
    %c0_30 = arith.constant 0 : index
    %51 = vector.load %arg4[%c128, %c0_30] : memref<528x256xf32, #tpu.memory_space<vmem>>, vector<128x256xf32>
    %cst_31 = arith.constant dense<0.000000e+00> : vector<1x256xf32>
    %52 = tpu.matmul %50, %51, %cst_31 {dimension_numbers = #tpu.dot_dimension_numbers<[1], [0], [0], [1], [0, 0, 1, 1], [], []>} : vector<1x128xf32>, vector<128x256xf32>, vector<1x256xf32> -> vector<1x256xf32>
    %c261 = arith.constant 261 : index
    %c0_32 = arith.constant 0 : index
    %53 = vector.load %arg5[%c261, %c0_32] : memref<272x512xf32, #tpu.memory_space<vmem>>, vector<1x256xf32>
    %54 = arith.addf %52, %53 : vector<1x256xf32>
    %55 = vector.shape_cast %54 : vector<1x256xf32> to vector<1x1x256xf32>
    %56 = vector.broadcast %55 : vector<1x1x256xf32> to vector<1x8x256xf32>
    %57 = arith.mulf %30, %56 : vector<1x8x256xf32>
    %58 = vector.shape_cast %57 : vector<1x8x256xf32> to vector<8x256xf32>
    %c256_33 = arith.constant 256 : index
    %c0_34 = arith.constant 0 : index
    %59 = vector.load %arg4[%c256_33, %c0_34] : memref<528x256xf32, #tpu.memory_space<vmem>>, vector<256x16xf32>
    %cst_35 = arith.constant dense<0.000000e+00> : vector<8x16xf32>
    %60 = tpu.matmul %58, %59, %cst_35 {dimension_numbers = #tpu.dot_dimension_numbers<[1], [0], [0], [1], [0, 0, 1, 1], [], []>} : vector<8x256xf32>, vector<256x16xf32>, vector<8x16xf32> -> vector<8x16xf32>
    %61 = vector.shape_cast %60 : vector<8x16xf32> to vector<1x8x16xf32>
    %cst_36 = arith.constant dense<0xFF800000> : vector<1x16xf32>
    %62 = vector.multi_reduction <maximumf>, %61, %cst_36 [1] : vector<1x8x16xf32> to vector<1x16xf32>
    %63 = vector.shape_cast %62 : vector<1x16xf32> to vector<1x1x16xf32>
    %64 = vector.broadcast %63 : vector<1x1x16xf32> to vector<1x8x16xf32>
    %65 = arith.subf %61, %64 : vector<1x8x16xf32>
    %66 = math.exp %65 : vector<1x8x16xf32>
    %cst_37 = arith.constant dense<0.000000e+00> : vector<1x16xf32>
    %67 = vector.multi_reduction <add>, %66, %cst_37 [1] : vector<1x8x16xf32> to vector<1x16xf32>
    %68 = vector.shape_cast %67 : vector<1x16xf32> to vector<1x1x16xf32>
    %69 = vector.broadcast %68 : vector<1x1x16xf32> to vector<1x8x16xf32>
    %70 = arith.divf %66, %69 : vector<1x8x16xf32>
    %71 = vector.shape_cast %70 : vector<1x8x16xf32> to vector<8x16xf32>
    %c512 = arith.constant 512 : index
    %c0_38 = arith.constant 0 : index
    %72 = vector.load %arg4[%c512, %c0_38] : memref<528x256xf32, #tpu.memory_space<vmem>>, vector<16x256xf32>
    %cst_39 = arith.constant dense<0.000000e+00> : vector<8x256xf32>
    %73 = tpu.matmul %71, %72, %cst_39 {dimension_numbers = #tpu.dot_dimension_numbers<[1], [0], [0], [1], [0, 0, 1, 1], [], []>} : vector<8x16xf32>, vector<16x256xf32>, vector<8x256xf32> -> vector<8x256xf32>
    %74 = arith.mulf %73, %29 : vector<8x256xf32>
    %75 = vector.shape_cast %74 : vector<8x256xf32> to vector<1x8x256xf32>
    %cst_40 = arith.constant dense<0.000000e+00> : vector<1x256xf32>
    %76 = vector.multi_reduction <add>, %75, %cst_40 [1] : vector<1x8x256xf32> to vector<1x256xf32>
    %c160 = arith.constant 160 : index
    %c0_41 = arith.constant 0 : index
    %77 = vector.load %arg3[%c160, %c0_41] : memref<936x128xf32, #tpu.memory_space<vmem>>, vector<256x128xf32>
    %cst_42 = arith.constant dense<0.000000e+00> : vector<1x128xf32>
    %78 = tpu.matmul %76, %77, %cst_42 {dimension_numbers = #tpu.dot_dimension_numbers<[1], [0], [0], [1], [0, 0, 1, 1], [], []>} : vector<1x256xf32>, vector<256x128xf32>, vector<1x128xf32> -> vector<1x128xf32>
    %c262 = arith.constant 262 : index
    %c0_43 = arith.constant 0 : index
    %79 = vector.load %arg5[%c262, %c0_43] : memref<272x512xf32, #tpu.memory_space<vmem>>, vector<1x128xf32>
    %80 = arith.addf %78, %79 : vector<1x128xf32>
    %81 = arith.addf %50, %80 : vector<1x128xf32>
    %cst_44 = arith.constant dense<0.000000e+00> : vector<1x128xf32>
    %82 = tpu.matmul %81, %0, %cst_44 {dimension_numbers = #tpu.dot_dimension_numbers<[1], [0], [0], [1], [0, 0, 1, 1], [], []>} : vector<1x128xf32>, vector<128x128xf32>, vector<1x128xf32> -> vector<1x128xf32>
    %83 = arith.subf %81, %82 : vector<1x128xf32>
    %84 = arith.mulf %83, %83 : vector<1x128xf32>
    %cst_45 = arith.constant dense<0.000000e+00> : vector<1x128xf32>
    %85 = tpu.matmul %84, %0, %cst_45 {dimension_numbers = #tpu.dot_dimension_numbers<[1], [0], [0], [1], [0, 0, 1, 1], [], []>} : vector<1x128xf32>, vector<128x128xf32>, vector<1x128xf32> -> vector<1x128xf32>
    %cst_46 = arith.constant 9.99999974E-6 : f32
    %86 = vector.broadcast %cst_46 : f32 to vector<1x128xf32>
    %87 = arith.addf %85, %86 : vector<1x128xf32>
    %88 = math.rsqrt %87 : vector<1x128xf32>
    %89 = arith.mulf %83, %88 : vector<1x128xf32>
    %c263 = arith.constant 263 : index
    %c0_47 = arith.constant 0 : index
    %90 = vector.load %arg5[%c263, %c0_47] : memref<272x512xf32, #tpu.memory_space<vmem>>, vector<1x128xf32>
    %91 = arith.mulf %89, %90 : vector<1x128xf32>
    %c264 = arith.constant 264 : index
    %c0_48 = arith.constant 0 : index
    %92 = vector.load %arg5[%c264, %c0_48] : memref<272x512xf32, #tpu.memory_space<vmem>>, vector<1x128xf32>
    %93 = arith.addf %91, %92 : vector<1x128xf32>
    %c0_49 = arith.constant 0 : index
    %c0_50 = arith.constant 0 : index
    %94 = vector.load %arg5[%c0_49, %c0_50] : memref<272x512xf32, #tpu.memory_space<vmem>>, vector<128x512xf32>
    %cst_51 = arith.constant dense<0.000000e+00> : vector<1x512xf32>
    %95 = tpu.matmul %93, %94, %cst_51 {dimension_numbers = #tpu.dot_dimension_numbers<[1], [0], [0], [1], [0, 0, 1, 1], [], []>} : vector<1x128xf32>, vector<128x512xf32>, vector<1x512xf32> -> vector<1x512xf32>
    %c265 = arith.constant 265 : index
    %c0_52 = arith.constant 0 : index
    %96 = vector.load %arg5[%c265, %c0_52] : memref<272x512xf32, #tpu.memory_space<vmem>>, vector<1x512xf32>
    %97 = arith.addf %95, %96 : vector<1x512xf32>
    %cst_53 = arith.constant 5.000000e-01 : f32
    %98 = vector.broadcast %cst_53 : f32 to vector<1x512xf32>
    %99 = arith.mulf %98, %97 : vector<1x512xf32>
    %cst_54 = arith.constant 0.707106769 : f32
    %100 = vector.broadcast %cst_54 : f32 to vector<1x512xf32>
    %101 = arith.mulf %97, %100 : vector<1x512xf32>
    %102 = math.absf %101 : vector<1x512xf32>
    %cst_55 = arith.constant 0.327591091 : f32
    %103 = vector.broadcast %cst_55 : f32 to vector<1x512xf32>
    %104 = arith.mulf %103, %102 : vector<1x512xf32>
    %cst_56 = arith.constant 1.000000e+00 : f32
    %105 = vector.broadcast %cst_56 : f32 to vector<1x512xf32>
    %106 = arith.addf %105, %104 : vector<1x512xf32>
    %cst_57 = arith.constant 1.000000e+00 : f32
    %107 = vector.broadcast %cst_57 : f32 to vector<1x512xf32>
    %108 = arith.divf %107, %106 : vector<1x512xf32>
    %cst_58 = arith.constant 1.06140542 : f32
    %109 = vector.broadcast %cst_58 : f32 to vector<1x512xf32>
    %110 = arith.mulf %109, %108 : vector<1x512xf32>
    %cst_59 = arith.constant -1.45315206 : f32
    %111 = vector.broadcast %cst_59 : f32 to vector<1x512xf32>
    %112 = arith.addf %110, %111 : vector<1x512xf32>
    %113 = arith.mulf %112, %108 : vector<1x512xf32>
    %cst_60 = arith.constant 1.42141378 : f32
    %114 = vector.broadcast %cst_60 : f32 to vector<1x512xf32>
    %115 = arith.addf %113, %114 : vector<1x512xf32>
    %116 = arith.mulf %115, %108 : vector<1x512xf32>
    %cst_61 = arith.constant -0.284496725 : f32
    %117 = vector.broadcast %cst_61 : f32 to vector<1x512xf32>
    %118 = arith.addf %116, %117 : vector<1x512xf32>
    %119 = arith.mulf %118, %108 : vector<1x512xf32>
    %cst_62 = arith.constant 0.254829586 : f32
    %120 = vector.broadcast %cst_62 : f32 to vector<1x512xf32>
    %121 = arith.addf %119, %120 : vector<1x512xf32>
    %122 = arith.mulf %121, %108 : vector<1x512xf32>
    %cst_63 = arith.constant 0.000000e+00 : f32
    %123 = vector.broadcast %cst_63 : f32 to vector<1x512xf32>
    %124 = arith.subf %123, %102 : vector<1x512xf32>
    %125 = arith.mulf %124, %102 : vector<1x512xf32>
    %126 = math.exp %125 : vector<1x512xf32>
    %127 = arith.mulf %122, %126 : vector<1x512xf32>
    %cst_64 = arith.constant 1.000000e+00 : f32
    %128 = vector.broadcast %cst_64 : f32 to vector<1x512xf32>
    %129 = arith.subf %128, %127 : vector<1x512xf32>
    %cst_65 = arith.constant 0.000000e+00 : f32
    %130 = vector.broadcast %cst_65 : f32 to vector<1x512xf32>
    %131 = arith.cmpf oge, %101, %130 : vector<1x512xf32>
    %cst_66 = arith.constant 0.000000e+00 : f32
    %132 = vector.broadcast %cst_66 : f32 to vector<1x512xf32>
    %133 = arith.subf %132, %129 : vector<1x512xf32>
    %134 = arith.select %131, %129, %133 : vector<1x512xi1>, vector<1x512xf32>
    %cst_67 = arith.constant 1.000000e+00 : f32
    %135 = vector.broadcast %cst_67 : f32 to vector<1x512xf32>
    %136 = arith.addf %135, %134 : vector<1x512xf32>
    %137 = arith.mulf %99, %136 : vector<1x512xf32>
    %c416 = arith.constant 416 : index
    %c0_68 = arith.constant 0 : index
    %138 = vector.load %arg3[%c416, %c0_68] : memref<936x128xf32, #tpu.memory_space<vmem>>, vector<512x128xf32>
    %cst_69 = arith.constant dense<0.000000e+00> : vector<1x128xf32>
    %139 = tpu.matmul %137, %138, %cst_69 {dimension_numbers = #tpu.dot_dimension_numbers<[1], [0], [0], [1], [0, 0, 1, 1], [], []>} : vector<1x512xf32>, vector<512x128xf32>, vector<1x128xf32> -> vector<1x128xf32>
    %c266 = arith.constant 266 : index
    %c0_70 = arith.constant 0 : index
    %140 = vector.load %arg5[%c266, %c0_70] : memref<272x512xf32, #tpu.memory_space<vmem>>, vector<1x128xf32>
    %141 = arith.addf %139, %140 : vector<1x128xf32>
    %142 = arith.addf %93, %141 : vector<1x128xf32>
    %cst_71 = arith.constant dense<0.000000e+00> : vector<1x128xf32>
    %143 = tpu.matmul %142, %0, %cst_71 {dimension_numbers = #tpu.dot_dimension_numbers<[1], [0], [0], [1], [0, 0, 1, 1], [], []>} : vector<1x128xf32>, vector<128x128xf32>, vector<1x128xf32> -> vector<1x128xf32>
    %144 = arith.subf %142, %143 : vector<1x128xf32>
    %145 = arith.mulf %144, %144 : vector<1x128xf32>
    %cst_72 = arith.constant dense<0.000000e+00> : vector<1x128xf32>
    %146 = tpu.matmul %145, %0, %cst_72 {dimension_numbers = #tpu.dot_dimension_numbers<[1], [0], [0], [1], [0, 0, 1, 1], [], []>} : vector<1x128xf32>, vector<128x128xf32>, vector<1x128xf32> -> vector<1x128xf32>
    %cst_73 = arith.constant 9.99999974E-6 : f32
    %147 = vector.broadcast %cst_73 : f32 to vector<1x128xf32>
    %148 = arith.addf %146, %147 : vector<1x128xf32>
    %149 = math.rsqrt %148 : vector<1x128xf32>
    %150 = arith.mulf %144, %149 : vector<1x128xf32>
    %c267 = arith.constant 267 : index
    %c0_74 = arith.constant 0 : index
    %151 = vector.load %arg5[%c267, %c0_74] : memref<272x512xf32, #tpu.memory_space<vmem>>, vector<1x128xf32>
    %152 = arith.mulf %150, %151 : vector<1x128xf32>
    %c268 = arith.constant 268 : index
    %c0_75 = arith.constant 0 : index
    %153 = vector.load %arg5[%c268, %c0_75] : memref<272x512xf32, #tpu.memory_space<vmem>>, vector<1x128xf32>
    %154 = arith.addf %152, %153 : vector<1x128xf32>
    %cst_76 = arith.constant dense<0.000000e+00> : vector<1x128xf32>
    %155 = tpu.matmul %154, %0, %cst_76 {dimension_numbers = #tpu.dot_dimension_numbers<[1], [0], [0], [1], [0, 0, 1, 1], [], []>} : vector<1x128xf32>, vector<128x128xf32>, vector<1x128xf32> -> vector<1x128xf32>
    %156 = arith.subf %154, %155 : vector<1x128xf32>
    %157 = arith.mulf %156, %156 : vector<1x128xf32>
    %cst_77 = arith.constant dense<0.000000e+00> : vector<1x128xf32>
    %158 = tpu.matmul %157, %0, %cst_77 {dimension_numbers = #tpu.dot_dimension_numbers<[1], [0], [0], [1], [0, 0, 1, 1], [], []>} : vector<1x128xf32>, vector<128x128xf32>, vector<1x128xf32> -> vector<1x128xf32>
    %cst_78 = arith.constant 9.99999974E-6 : f32
    %159 = vector.broadcast %cst_78 : f32 to vector<1x128xf32>
    %160 = arith.addf %158, %159 : vector<1x128xf32>
    %161 = math.rsqrt %160 : vector<1x128xf32>
    %162 = arith.mulf %156, %161 : vector<1x128xf32>
    %c269 = arith.constant 269 : index
    %c0_79 = arith.constant 0 : index
    %163 = vector.load %arg5[%c269, %c0_79] : memref<272x512xf32, #tpu.memory_space<vmem>>, vector<1x128xf32>
    %164 = arith.mulf %162, %163 : vector<1x128xf32>
    %c270 = arith.constant 270 : index
    %c0_80 = arith.constant 0 : index
    %165 = vector.load %arg5[%c270, %c0_80] : memref<272x512xf32, #tpu.memory_space<vmem>>, vector<1x128xf32>
    %166 = arith.addf %164, %165 : vector<1x128xf32>
    %c128_81 = arith.constant 128 : index
    %c0_82 = arith.constant 0 : index
    %167 = vector.load %arg5[%c128_81, %c0_82] : memref<272x512xf32, #tpu.memory_space<vmem>>, vector<128x512xf32>
    %cst_83 = arith.constant dense<0.000000e+00> : vector<1x512xf32>
    %168 = tpu.matmul %166, %167, %cst_83 {dimension_numbers = #tpu.dot_dimension_numbers<[1], [0], [0], [1], [0, 0, 1, 1], [], []>} : vector<1x128xf32>, vector<128x512xf32>, vector<1x512xf32> -> vector<1x512xf32>
    %c271 = arith.constant 271 : index
    %c0_84 = arith.constant 0 : index
    %169 = vector.load %arg5[%c271, %c0_84] : memref<272x512xf32, #tpu.memory_space<vmem>>, vector<1x512xf32>
    %170 = arith.addf %168, %169 : vector<1x512xf32>
    %c0_85 = arith.constant 0 : index
    %c0_86 = arith.constant 0 : index
    %171 = vector.load %arg6[%c0_85, %c0_86] : memref<1x512xf32, #tpu.memory_space<vmem>>, vector<1x512xf32>
    tpu.vector_store %arg6[%c0_85, %c0_86], %170 {strides = array<i32>} : memref<1x512xf32, #tpu.memory_space<vmem>>, vector<1x512xf32>,
    return
  }
  func.func @transform_0(%arg0: i32) -> (i32, i32) {
    %c0_i32 = arith.constant 0 : i32
    %c0_i32_0 = arith.constant 0 : i32
    return %arg0, %c0_i32 : i32, i32
  }
  func.func @transform_1(%arg0: i32) -> (i32, i32) {
    %c0_i32 = arith.constant 0 : i32
    %c0_i32_0 = arith.constant 0 : i32
    return %arg0, %c0_i32 : i32, i32
  }
  func.func @transform_2(%arg0: i32) -> (i32, i32) {
    %c0_i32 = arith.constant 0 : i32
    %c0_i32_0 = arith.constant 0 : i32
    %c0_i32_1 = arith.constant 0 : i32
    return %c0_i32, %c0_i32_0 : i32, i32
  }
  func.func @transform_3(%arg0: i32) -> (i32, i32) {
    %c0_i32 = arith.constant 0 : i32
    %c0_i32_0 = arith.constant 0 : i32
    %c0_i32_1 = arith.constant 0 : i32
    return %c0_i32, %c0_i32_0 : i32, i32
  }
  func.func @transform_4(%arg0: i32) -> (i32, i32) {
    %c0_i32 = arith.constant 0 : i32
    %c0_i32_0 = arith.constant 0 : i32
    %c0_i32_1 = arith.constant 0 : i32
    return %c0_i32, %c0_i32_0 : i32, i32
  }
  func.func @transform_5(%arg0: i32) -> (i32, i32) {
    %c0_i32 = arith.constant 0 : i32
    %c0_i32_0 = arith.constant 0 : i32
    return %arg0, %c0_i32 : i32, i32
  }
}

</mosaic_0001>

<llo_original>
// kernel: tile.92
$region0: #{tile.92}
  #allocation0 [shape = 's32[1]{0}', space=sflag, size = 0x4, scoped, tag = 'scoped memory for tile.92']
  %s0 = inlined_call_operand.vmem [shape: f32[32], index: 0, kind: input, shape index: {}]
  %s1 = inlined_call_operand.vmem [shape: f32[4,32], index: 1, kind: output, shape index: {}]
  // Predicated region
  $region2: #{tile.92} parent=0 // pred_check
    _
  $region3: #{tile.92} parent=0 // pred_check_branch
    %3 = sbr.rel (0) target = $region5
  $region4: #{tile.92} parent=0 // pred_region
    _
  $region5: #{tile.92} parent=0 // pred_fallthru
    _
  %v4 = vld [vmem:[%s0] ss:$0 sm:$0xff]
  %5 = vst [vmem:[%s1] sm:$0xf] %v4

// kernel: tile.111
$region0: #{tile.111}
  #allocation0 [shape = 's32[1]{0}', space=sflag, size = 0x4, scoped, tag = 'scoped memory for tile.111']
  %s0 = inlined_call_operand.vmem [shape: f32[64], index: 0, kind: input, shape index: {}]
  %s1 = inlined_call_operand.vmem [shape: f32[4,64], index: 1, kind: output, shape index: {}]
  // Predicated region
  $region2: #{tile.111} parent=0 // pred_check
    _
  $region3: #{tile.111} parent=0 // pred_check_branch
    %3 = sbr.rel (0) target = $region5
  $region4: #{tile.111} parent=0 // pred_region
    _
  $region5: #{tile.111} parent=0 // pred_fallthru
    _
  %v4 = vld [vmem:[%s0] ss:$0 sm:$0xff]
  %5 = vst [vmem:[%s1] sm:$0xf] %v4

// kernel: tile.136
$region0: #{tile.136}
  #allocation0 [shape = 's32[1]{0}', space=sflag, size = 0x4, scoped, tag = 'scoped memory for tile.136']
  %s0 = inlined_call_operand.vmem [shape: f32[128], index: 0, kind: input, shape index: {}]
  %s1 = inlined_call_operand.vmem [shape: f32[4,128], index: 1, kind: output, shape index: {}]
  // Predicated region
  $region2: #{tile.136} parent=0 // pred_check
    _
  $region3: #{tile.136} parent=0 // pred_check_branch
    %3 = sbr.rel (0) target = $region5
  $region4: #{tile.136} parent=0 // pred_region
    _
  $region5: #{tile.136} parent=0 // pred_fallthru
    _
  %v4 = vld [vmem:[%s0] ss:$0 sm:$0xff]
  %5 = vst [vmem:[%s1] sm:$0xf] %v4

// kernel: squeeze.3
$region0: #{squeeze.3}
  %s0 = inlined_call_operand.vmem [shape: f32[4,1,8], index: 0, kind: input, shape index: {}]
  %s1 = inlined_call_operand.vmem [shape: f32[1,32], index: 1, kind: output, shape index: {}]
  $region1: #{squeeze.3} parent=0
    #allocation0 [shape = 'u8[4096]{0}', space=vmem, size = 0x1000, scoped, tag = 'scoped mem for output reshape']
    #allocation1 [shape = 'u8[4096]{0}', space=vmem, size = 0x1000, scoped, tag = 'scoped mem for input reshape']
    %s3 = sshllo.u32 0, 4
    %v4 = vld [vmem:[%s0] sm:%s3]
    %5 = vst [vmem:[#allocation1] sm:%s3] %v4
    %v6 = vld [vmem:[#allocation1] sm:$0x1]
    %vm7 = vcmask 64512
    %8 = vst.msk [vmem:[#allocation0] sm:$0x1] %vm7, %v6
    %s9 = scalar_lea.vmem [#allocation1], 3
    %v10 = vld [vmem:[%s9] sm:$0x1]
    %11 = vrot.lane.b32.xlu0 %v10, 24
    %v12 = vpop.permute.xlu0 %11
    %vm13 = vcmask 261312
    %14 = vst.msk [vmem:[#allocation0] sm:$0x1] %vm13, %v12
    %s15 = scalar_lea.vmem [#allocation1], 2
    %v16 = vld [vmem:[%s15] sm:$0x1]
    %17 = vrot.lane.b32.xlu0 %v16, 16
    %v18 = vpop.permute.xlu0 %17
    %vm19 = vcmask 195712
    %20 = vst.msk [vmem:[#allocation0] sm:$0x1] %vm19, %v18
    %s21 = scalar_lea.vmem [#allocation1], 1
    %v22 = vld [vmem:[%s21] sm:$0x1]
    %23 = vrot.lane.b32.xlu0 %v22, 8
    %v24 = vpop.permute.xlu0 %23
    %vm25 = vcmask 130112
    %26 = vst.msk [vmem:[#allocation0] sm:$0x1] %vm25, %v24
    %s28 = sshllo.u32 0, 1
    %v30 = vld [vmem:[#allocation0] sm:%s28]
    %s31 = sshllo.u32 0, 1
    %32 = vst [vmem:[%s1] sm:%s31] %v30

// kernel: btc_transformer_forward.1
$region0: #{btc_transformer_forward.1}
  #allocation0 [shape = 'u32[]', space=smem, size = 0x4, offset = 0x4, fixed_abs, tag = 'smem constant byte address 0x4 - core index']
  #allocation1 [shape = 'u32[144,128]{1,0:T(1,128)}', space=vmem, size = 0x12000, scoped, tag = 'internal scratch']
  %s0 = inlined_call_operand.vmem [shape: f32[8,32], index: 0, kind: input, shape index: {}]
  %s1 = inlined_call_operand.vmem [shape: f32[1,32], index: 1, kind: input, shape index: {}]
  %s2 = inlined_call_operand.vmem [shape: f32[936,128], index: 2, kind: input, shape index: {}]
  %s3 = inlined_call_operand.vmem [shape: f32[528,256], index: 3, kind: input, shape index: {}]
  %s4 = inlined_call_operand.vmem [shape: f32[272,512], index: 4, kind: input, shape index: {}]
  %s5 = inlined_call_operand.vmem [shape: f32[1,512], index: 5, kind: output, shape index: {}]
  %s6 = sld [smem:[#allocation0]]
  $region30: #{btc_transformer_forward.1} parent=0
    _
  %s8 = ssub.s32 1, %s6
  %s9 = scalar_select 0, %s8, %s6
  // Predicated region
  $region2: #{btc_transformer_forward.1} parent=0 // pred_check
    _
  $region3: #{btc_transformer_forward.1} parent=0 // pred_check_branch
    %11 = sbr.rel (0) target = $region5
  $region4: #{btc_transformer_forward.1} parent=0 // pred_region
    _
  $region5: #{btc_transformer_forward.1} parent=0 // pred_fallthru
    _
  // Predicated region
  $region6: #{btc_transformer_forward.1} parent=0 // pred_check
    _
  $region7: #{btc_transformer_forward.1} parent=0 // pred_check_branch
    %13 = sbr.rel (0) target = $region9
  $region8: #{btc_transformer_forward.1} parent=0 // pred_region
    _
  $region9: #{btc_transformer_forward.1} parent=0 // pred_fallthru
    _
  // Predicated region
  $region10: #{btc_transformer_forward.1} parent=0 // pred_check
    _
  $region11: #{btc_transformer_forward.1} parent=0 // pred_check_branch
    %15 = sbr.rel (0) target = $region13
  $region12: #{btc_transformer_forward.1} parent=0 // pred_region
    _
  $region13: #{btc_transformer_forward.1} parent=0 // pred_fallthru
    _
  // Predicated region
  $region14: #{btc_transformer_forward.1} parent=0 // pred_check
    _
  $region15: #{btc_transformer_forward.1} parent=0 // pred_check_branch
    %17 = sbr.rel (0) target = $region17
  $region16: #{btc_transformer_forward.1} parent=0 // pred_region
    _
  $region17: #{btc_transformer_forward.1} parent=0 // pred_fallthru
    _
  // Predicated region
  $region18: #{btc_transformer_forward.1} parent=0 // pred_check
    _
  $region19: #{btc_transformer_forward.1} parent=0 // pred_check_branch
    %19 = sbr.rel (0) target = $region21
  $region20: #{btc_transformer_forward.1} parent=0 // pred_region
    _
  $region21: #{btc_transformer_forward.1} parent=0 // pred_fallthru
    _
  %v20 = vld [vmem:[%s2 + $0x20] sm:$0xff]
  %v21 = vld [vmem:[%s2 + $0x28] sm:$0xff]
  %v22 = vld [vmem:[%s2 + $0x30] sm:$0xff]
  %v23 = vld [vmem:[%s2 + $0x38] sm:$0xff]
  %v24 = vld [vmem:[%s2 + $0x40] sm:$0xff]
  %v25 = vld [vmem:[%s2 + $0x48] sm:$0xff]
  %v26 = vld [vmem:[%s2 + $0x50] sm:$0xff]
  %v27 = vld [vmem:[%s2 + $0x58] sm:$0xff]
  %v28 = vld [vmem:[%s2 + $0x60] sm:$0xff]
  %v29 = vld [vmem:[%s2 + $0x68] sm:$0xff]
  %v30 = vld [vmem:[%s2 + $0x70] sm:$0xff]
  %v31 = vld [vmem:[%s2 + $0x78] sm:$0xff]
  %v32 = vld [vmem:[%s2 + $0x80] sm:$0xff]
  %v33 = vld [vmem:[%s2 + $0x88] sm:$0xff]
  %v34 = vld [vmem:[%s2 + $0x90] sm:$0xff]
  %v35 = vld [vmem:[%s2 + $0x98] sm:$0xff]
  %v36 = vld [vmem:[%s2] sm:$0xff]
  %v37 = vld [vmem:[%s2 + $0x8] sm:$0xff]
  %v38 = vld [vmem:[%s2 + $0x10] sm:$0xff]
  %v39 = vld [vmem:[%s2 + $0x18] sm:$0xff]
  %v40 = vld [vmem:[%s0] sm:$0xff]
  %v41 = vld [vmem:[%s4 + $0x400] ss:$0 sm:$0xff]
  %vm42 = vcmask 261120
  %v44 = vsel %vm42, %v40, 0
  %46 = vmatprep.subr.mxu0 0.0
  %47 = vmatpush1.msra.mxu0 %v36
  %48 = vmatprep.subr.mxu0 0.0
  %49 = vmatpush1.msra.mxu0 %v37
  %50 = vmatprep.subr.mxu0 0.0
  %51 = vmatpush1.msra.mxu0 %v38
  %52 = vmatprep.subr.mxu0 0.0
  %53 = vmatpush1.msra.mxu0 %v39
  %54 = vmatprep.subr.mxu0 0.0
  %55 = vmatpush1.msra.mxu0 0.0
  %56 = vmatprep.subr.mxu0 0.0
  %57 = vmatpush1.msra.mxu0 0.0
  %58 = vmatprep.subr.mxu0 0.0
  %59 = vmatpush1.msra.mxu0 0.0
  %60 = vmatprep.subr.mxu0 0.0
  %61 = vmatpush1.msra.mxu0 0.0
  %62 = vmatprep.subr.mxu0 0.0
  %63 = vmatpush1.msra.mxu0 0.0
  %64 = vmatprep.subr.mxu0 0.0
  %65 = vmatpush1.msra.mxu0 0.0
  %66 = vmatprep.subr.mxu0 0.0
  %67 = vmatpush1.msra.mxu0 0.0
  %68 = vmatprep.subr.mxu0 0.0
  %69 = vmatpush1.msra.mxu0 0.0
  %70 = vmatprep.subr.mxu0 0.0
  %71 = vmatpush1.msra.mxu0 0.0
  %72 = vmatprep.subr.mxu0 0.0
  %73 = vmatpush1.msra.mxu0 0.0
  %74 = vmatprep.subr.mxu0 0.0
  %75 = vmatpush1.msra.mxu0 0.0
  %76 = vmatprep.subr.mxu0 0.0
  %77 = vmatpush1.msra.mxu0 0.0
  %78 = vmatprep.subr.mxu0 0.0
  %79 = vmatpush1.msra.mxu0 0.0
  %80 = vmatprep.subr.mxu0 0.0
  %81 = vmatpush1.msra.mxu0 0.0
  %82 = vmatprep.subr.mxu0 0.0
  %83 = vmatpush1.msra.mxu0 0.0
  %84 = vmatprep.subr.mxu0 0.0
  %85 = vmatpush1.msra.mxu0 0.0
  %86 = vmatprep.subr.mxu0 0.0
  %87 = vmatpush1.msra.mxu0 0.0
  %88 = vmatprep.subr.mxu0 0.0
  %89 = vmatpush1.msra.mxu0 0.0
  %90 = vmatprep.subr.mxu0 0.0
  %91 = vmatpush1.msra.mxu0 0.0
  %92 = vmatprep.subr.mxu0 0.0
  %93 = vmatpush1.msra.mxu0 0.0
  %94 = vmatprep.subr.mxu0 0.0
  %95 = vmatpush1.msra.mxu0 0.0
  %96 = vmatprep.subr.mxu0 0.0
  %97 = vmatpush1.msra.mxu0 0.0
  %98 = vmatprep.subr.mxu0 0.0
  %99 = vmatpush1.msra.mxu0 0.0
  %100 = vmatprep.subr.mxu0 0.0
  %101 = vmatpush1.msra.mxu0 0.0
  %102 = vmatprep.subr.mxu0 0.0
  %103 = vmatpush1.msra.mxu0 0.0
  %104 = vmatprep.subr.mxu0 0.0
  %105 = vmatpush1.msra.mxu0 0.0
  %106 = vmatprep.subr.mxu0 0.0
  %107 = vmatpush1.msra.mxu0 0.0
  %108 = vmatprep.subr.mxu0 0.0
  %109 = vmatpush1.msra.mxu0 0.0
  %110 = vmatprep.mubr.f32.mxu0 0.0
  %111 = vmatmul.mubr.f32.gmra.mrb[0].mxu0 %v44
  %v112 = vpop.f32.mrb[0].mxu0
  %v113 = vadd.f32 %v41, %v112
  %v114 = vpop.f32.mrb[0].mxu0
  %115 = vdwg.mxu0
  %116 = vmatprep.subr.mxu0 0.0
  %117 = vmatpush1.msra.mxu0 %v20
  %118 = vmatprep.subr.mxu0 0.0
  %119 = vmatpush1.msra.mxu0 %v21
  %120 = vmatprep.subr.mxu0 0.0
  %121 = vmatpush1.msra.mxu0 %v22
  %122 = vmatprep.subr.mxu0 0.0
  %123 = vmatpush1.msra.mxu0 %v23
  %124 = vmatprep.subr.mxu0 0.0
  %125 = vmatpush1.msra.mxu0 %v24
  %126 = vmatprep.subr.mxu0 0.0
  %127 = vmatpush1.msra.mxu0 %v25
  %128 = vmatprep.subr.mxu0 0.0
  %129 = vmatpush1.msra.mxu0 %v26
  %130 = vmatprep.subr.mxu0 0.0
  %131 = vmatpush1.msra.mxu0 %v27
  %132 = vmatprep.subr.mxu0 0.0
  %133 = vmatpush1.msra.mxu0 %v28
  %134 = vmatprep.subr.mxu0 0.0
  %135 = vmatpush1.msra.mxu0 %v29
  %136 = vmatprep.subr.mxu0 0.0
  %137 = vmatpush1.msra.mxu0 %v30
  %138 = vmatprep.subr.mxu0 0.0
  %139 = vmatpush1.msra.mxu0 %v31
  %140 = vmatprep.subr.mxu0 0.0
  %141 = vmatpush1.msra.mxu0 %v32
  %142 = vmatprep.subr.mxu0 0.0
  %143 = vmatpush1.msra.mxu0 %v33
  %144 = vmatprep.subr.mxu0 0.0
  %145 = vmatpush1.msra.mxu0 %v34
  %146 = vmatprep.subr.mxu0 0.0
  %147 = vmatpush1.msra.mxu0 %v35
  %148 = vmatprep.subr.mxu0 0.0
  %149 = vmatpush1.msra.mxu0 0.0
  %150 = vmatprep.subr.mxu0 0.0
  %151 = vmatpush1.msra.mxu0 0.0
  %152 = vmatprep.subr.mxu0 0.0
  %153 = vmatpush1.msra.mxu0 0.0
  %154 = vmatprep.subr.mxu0 0.0
  %155 = vmatpush1.msra.mxu0 0.0
  %156 = vmatprep.subr.mxu0 0.0
  %157 = vmatpush1.msra.mxu0 0.0
  %158 = vmatprep.subr.mxu0 0.0
  %159 = vmatpush1.msra.mxu0 0.0
  %160 = vmatprep.subr.mxu0 0.0
  %161 = vmatpush1.msra.mxu0 0.0
  %162 = vmatprep.subr.mxu0 0.0
  %163 = vmatpush1.msra.mxu0 0.0
  %164 = vmatprep.subr.mxu0 0.0
  %165 = vmatpush1.msra.mxu0 0.0
  %166 = vmatprep.subr.mxu0 0.0
  %167 = vmatpush1.msra.mxu0 0.0
  %168 = vmatprep.subr.mxu0 0.0
  %169 = vmatpush1.msra.mxu0 0.0
  %170 = vmatprep.subr.mxu0 0.0
  %171 = vmatpush1.msra.mxu0 0.0
  %172 = vmatprep.subr.mxu0 0.0
  %173 = vmatpush1.msra.mxu0 0.0
  %174 = vmatprep.subr.mxu0 0.0
  %175 = vmatpush1.msra.mxu0 0.0
  %176 = vmatprep.subr.mxu0 0.0
  %177 = vmatpush1.msra.mxu0 0.0
  %178 = vmatprep.subr.mxu0 0.0
  %179 = vmatpush1.msra.mxu0 0.0
  %180 = vmatprep.mubr.f32.mxu0 0.0
  %181 = vmatmul.mubr.f32.gmra.mrb[0].mxu0 %v113
  %v182 = vpop.f32.mrb[0].mxu0
  %v183 = vadd.f32 0.0, %v182
  %v184 = vpop.f32.mrb[0].mxu0
  %185 = vdwg.mxu0
  %v186 = vsub.f32 %v113, %v183
  %v187 = vmul.f32 %v186, %v186
  %188 = vmatprep.subr.mxu0 0.0
  %189 = vmatpush1.msra.mxu0 %v20
  %190 = vmatprep.subr.mxu0 0.0
  %191 = vmatpush1.msra.mxu0 %v21
  %192 = vmatprep.subr.mxu0 0.0
  %193 = vmatpush1.msra.mxu0 %v22
  %194 = vmatprep.subr.mxu0 0.0
  %195 = vmatpush1.msra.mxu0 %v23
  %196 = vmatprep.subr.mxu0 0.0
  %197 = vmatpush1.msra.mxu0 %v24
  %198 = vmatprep.subr.mxu0 0.0
  %199 = vmatpush1.msra.mxu0 %v25
  %200 = vmatprep.subr.mxu0 0.0
  %201 = vmatpush1.msra.mxu0 %v26
  %202 = vmatprep.subr.mxu0 0.0
  %203 = vmatpush1.msra.mxu0 %v27
  %204 = vmatprep.subr.mxu0 0.0
  %205 = vmatpush1.msra.mxu0 %v28
  %206 = vmatprep.subr.mxu0 0.0
  %207 = vmatpush1.msra.mxu0 %v29
  %208 = vmatprep.subr.mxu0 0.0
  %209 = vmatpush1.msra.mxu0 %v30
  %210 = vmatprep.subr.mxu0 0.0
  %211 = vmatpush1.msra.mxu0 %v31
  %212 = vmatprep.subr.mxu0 0.0
  %213 = vmatpush1.msra.mxu0 %v32
  %214 = vmatprep.subr.mxu0 0.0
  %215 = vmatpush1.msra.mxu0 %v33
  %216 = vmatprep.subr.mxu0 0.0
  %217 = vmatpush1.msra.mxu0 %v34
  %218 = vmatprep.subr.mxu0 0.0
  %219 = vmatpush1.msra.mxu0 %v35
  %220 = vmatprep.subr.mxu0 0.0
  %221 = vmatpush1.msra.mxu0 0.0
  %222 = vmatprep.subr.mxu0 0.0
  %223 = vmatpush1.msra.mxu0 0.0
  %224 = vmatprep.subr.mxu0 0.0
  %225 = vmatpush1.msra.mxu0 0.0
  %226 = vmatprep.subr.mxu0 0.0
  %227 = vmatpush1.msra.mxu0 0.0
  %228 = vmatprep.subr.mxu0 0.0
  %229 = vmatpush1.msra.mxu0 0.0
  %230 = vmatprep.subr.mxu0 0.0
  %231 = vmatpush1.msra.mxu0 0.0
  %232 = vmatprep.subr.mxu0 0.0
  %233 = vmatpush1.msra.mxu0 0.0
  %234 = vmatprep.subr.mxu0 0.0
  %235 = vmatpush1.msra.mxu0 0.0
  %236 = vmatprep.subr.mxu0 0.0
  %237 = vmatpush1.msra.mxu0 0.0
  %238 = vmatprep.subr.mxu0 0.0
  %239 = vmatpush1.msra.mxu0 0.0
  %240 = vmatprep.subr.mxu0 0.0
  %241 = vmatpush1.msra.mxu0 0.0
  %242 = vmatprep.subr.mxu0 0.0
  %243 = vmatpush1.msra.mxu0 0.0
  %244 = vmatprep.subr.mxu0 0.0
  %245 = vmatpush1.msra.mxu0 0.0
  %246 = vmatprep.subr.mxu0 0.0
  %247 = vmatpush1.msra.mxu0 0.0
  %248 = vmatprep.subr.mxu0 0.0
  %249 = vmatpush1.msra.mxu0 0.0
  %250 = vmatprep.subr.mxu0 0.0
  %251 = vmatpush1.msra.mxu0 0.0
  %252 = vmatprep.mubr.f32.mxu0 0.0
  %253 = vmatmul.mubr.f32.gmra.mrb[0].mxu0 %v187
  %v254 = vpop.f32.mrb[0].mxu0
  %v255 = vadd.f32 1e-05, %v254
  %v256 = vpop.f32.mrb[0].mxu0
  %257 = vdwg.mxu0
  %v258 = vrsqrt.pop %v255
  %v259 = vmul.f32 %v186, %v258
  %v260 = vld [vmem:[%s4 + $0x401] ss:$0 sm:$0xff]
  %v261 = vmul.f32 %v259, %v260
  %v262 = vld [vmem:[%s4 + $0x402] ss:$0 sm:$0xff]
  %v263 = vadd.f32 %v261, %v262
  %v264 = vmax.f32 %v263, 0.0
  %v265 = vld [vmem:[%s2 + $0x3a0] sm:$0xff]
  %v266 = vadd.f32 %v264, %v265
  %v267 = vld [vmem:[%s3] sm:$0xff]
  %v268 = vld [vmem:[%s3 + $0x8] sm:$0xff]
  %v269 = vld [vmem:[%s3 + $0x10] sm:$0xff]
  %v270 = vld [vmem:[%s3 + $0x18] sm:$0xff]
  %v271 = vld [vmem:[%s3 + $0x20] sm:$0xff]
  %v272 = vld [vmem:[%s3 + $0x28] sm:$0xff]
  %v273 = vld [vmem:[%s3 + $0x30] sm:$0xff]
  %v274 = vld [vmem:[%s3 + $0x38] sm:$0xff]
  %v275 = vld [vmem:[%s3 + $0x40] sm:$0xff]
  %v276 = vld [vmem:[%s3 + $0x48] sm:$0xff]
  %v277 = vld [vmem:[%s3 + $0x50] sm:$0xff]
  %v278 = vld [vmem:[%s3 + $0x58] sm:$0xff]
  %v279 = vld [vmem:[%s3 + $0x60] sm:$0xff]
  %v280 = vld [vmem:[%s3 + $0x68] sm:$0xff]
  %v281 = vld [vmem:[%s3 + $0x70] sm:$0xff]
  %v282 = vld [vmem:[%s3 + $0x78] sm:$0xff]
  %v283 = vld [vmem:[%s3 + $0x80] sm:$0xff]
  %v284 = vld [vmem:[%s3 + $0x88] sm:$0xff]
  %v285 = vld [vmem:[%s3 + $0x90] sm:$0xff]
  %v286 = vld [vmem:[%s3 + $0x98] sm:$0xff]
  %v287 = vld [vmem:[%s3 + $0xa0] sm:$0xff]
  %v288 = vld [vmem:[%s3 + $0xa8] sm:$0xff]
  %v289 = vld [vmem:[%s3 + $0xb0] sm:$0xff]
  %v290 = vld [vmem:[%s3 + $0xb8] sm:$0xff]
  %v291 = vld [vmem:[%s3 + $0xc0] sm:$0xff]
  %v292 = vld [vmem:[%s3 + $0xc8] sm:$0xff]
  %v293 = vld [vmem:[%s3 + $0xd0] sm:$0xff]
  %v294 = vld [vmem:[%s3 + $0xd8] sm:$0xff]
  %v295 = vld [vmem:[%s3 + $0xe0] sm:$0xff]
  %v296 = vld [vmem:[%s3 + $0xe8] sm:$0xff]
  %v297 = vld [vmem:[%s3 + $0xf0] sm:$0xff]
  %v298 = vld [vmem:[%s3 + $0xf8] sm:$0xff]
  %s299 = scalar_lea.vmem %s4, 1028
  %v300 = vld [vmem:[%s299] ss:$8 sm:$0x3]
  %v302 = vlaneseq
  %v303 = vshrl.u32 %v302, 7
  %v304 = vsub.s32 0, %v303
  %v305 = vrot.slane %v300, %v304
  %v306 = vlaneseq
  %v307 = vshrl.u32 %v306, 7
  %v308 = vsub.s32 1, %v307
  %v309 = vrot.slane %v300, %v308
  %312 = vmatprep.subr.mxu0 %v268
  %313 = vmatpush1.msra.mxu0 %v267
  %314 = vmatprep.subr.mxu0 %v270
  %315 = vmatpush1.msra.mxu0 %v269
  %316 = vmatprep.subr.mxu0 %v272
  %317 = vmatpush1.msra.mxu0 %v271
  %318 = vmatprep.subr.mxu0 %v274
  %319 = vmatpush1.msra.mxu0 %v273
  %320 = vmatprep.subr.mxu0 %v276
  %321 = vmatpush1.msra.mxu0 %v275
  %322 = vmatprep.subr.mxu0 %v278
  %323 = vmatpush1.msra.mxu0 %v277
  %324 = vmatprep.subr.mxu0 %v280
  %325 = vmatpush1.msra.mxu0 %v279
  %326 = vmatprep.subr.mxu0 %v282
  %327 = vmatpush1.msra.mxu0 %v281
  %328 = vmatprep.subr.mxu0 %v284
  %329 = vmatpush1.msra.mxu0 %v283
  %330 = vmatprep.subr.mxu0 %v286
  %331 = vmatpush1.msra.mxu0 %v285
  %332 = vmatprep.subr.mxu0 %v288
  %333 = vmatpush1.msra.mxu0 %v287
  %334 = vmatprep.subr.mxu0 %v290
  %335 = vmatpush1.msra.mxu0 %v289
  %336 = vmatprep.subr.mxu0 %v292
  %337 = vmatpush1.msra.mxu0 %v291
  %338 = vmatprep.subr.mxu0 %v294
  %339 = vmatpush1.msra.mxu0 %v293
  %340 = vmatprep.subr.mxu0 %v296
  %341 = vmatpush1.msra.mxu0 %v295
  %342 = vmatprep.subr.mxu0 %v298
  %343 = vmatpush1.msra.mxu0 %v297
  %344 = vmatprep.subr.mxu0 0.0
  %345 = vmatpush1.msra.mxu0 0.0
  %346 = vmatprep.subr.mxu0 0.0
  %347 = vmatpush1.msra.mxu0 0.0
  %348 = vmatprep.subr.mxu0 0.0
  %349 = vmatpush1.msra.mxu0 0.0
  %350 = vmatprep.subr.mxu0 0.0
  %351 = vmatpush1.msra.mxu0 0.0
  %352 = vmatprep.subr.mxu0 0.0
  %353 = vmatpush1.msra.mxu0 0.0
  %354 = vmatprep.subr.mxu0 0.0
  %355 = vmatpush1.msra.mxu0 0.0
  %356 = vmatprep.subr.mxu0 0.0
  %357 = vmatpush1.msra.mxu0 0.0
  %358 = vmatprep.subr.mxu0 0.0
  %359 = vmatpush1.msra.mxu0 0.0
  %360 = vmatprep.subr.mxu0 0.0
  %361 = vmatpush1.msra.mxu0 0.0
  %362 = vmatprep.subr.mxu0 0.0
  %363 = vmatpush1.msra.mxu0 0.0
  %364 = vmatprep.subr.mxu0 0.0
  %365 = vmatpush1.msra.mxu0 0.0
  %366 = vmatprep.subr.mxu0 0.0
  %367 = vmatpush1.msra.mxu0 0.0
  %368 = vmatprep.subr.mxu0 0.0
  %369 = vmatpush1.msra.mxu0 0.0
  %370 = vmatprep.subr.mxu0 0.0
  %371 = vmatpush1.msra.mxu0 0.0
  %372 = vmatprep.subr.mxu0 0.0
  %373 = vmatpush1.msra.mxu0 0.0
  %374 = vmatprep.subr.mxu0 0.0
  %375 = vmatpush1.msra.mxu0 0.0
  %376 = vmatprep.mubr.f32.mxu0 0.0
  %377 = vmatmul.mubr.f32.gmra.mrb[0].mxu0 %v266
  %v378 = vpop.f32.mrb[0].mxu0
  %v379 = vadd.f32 %v305, %v378
  %v380 = vpop.f32.mrb[0].mxu0
  %v381 = vadd.f32 %v309, %v380
  %382 = vdwg.mxu0
  %v383 = vld [vmem:[%s1] sm:$0x1]
  %v385 = vsel %vm42, %v383, 0
  %387 = vmatprep.subr.mxu0 0.0
  %388 = vmatpush1.msra.mxu0 %v36
  %389 = vmatprep.subr.mxu0 0.0
  %390 = vmatpush1.msra.mxu0 %v37
  %391 = vmatprep.subr.mxu0 0.0
  %392 = vmatpush1.msra.mxu0 %v38
  %393 = vmatprep.subr.mxu0 0.0
  %394 = vmatpush1.msra.mxu0 %v39
  %395 = vmatprep.subr.mxu0 0.0
  %396 = vmatpush1.msra.mxu0 0.0
  %397 = vmatprep.subr.mxu0 0.0
  %398 = vmatpush1.msra.mxu0 0.0
  %399 = vmatprep.subr.mxu0 0.0
  %400 = vmatpush1.msra.mxu0 0.0
  %401 = vmatprep.subr.mxu0 0.0
  %402 = vmatpush1.msra.mxu0 0.0
  %403 = vmatprep.subr.mxu0 0.0
  %404 = vmatpush1.msra.mxu0 0.0
  %405 = vmatprep.subr.mxu0 0.0
  %406 = vmatpush1.msra.mxu0 0.0
  %407 = vmatprep.subr.mxu0 0.0
  %408 = vmatpush1.msra.mxu0 0.0
  %409 = vmatprep.subr.mxu0 0.0
  %410 = vmatpush1.msra.mxu0 0.0
  %411 = vmatprep.subr.mxu0 0.0
  %412 = vmatpush1.msra.mxu0 0.0
  %413 = vmatprep.subr.mxu0 0.0
  %414 = vmatpush1.msra.mxu0 0.0
  %415 = vmatprep.subr.mxu0 0.0
  %416 = vmatpush1.msra.mxu0 0.0
  %417 = vmatprep.subr.mxu0 0.0
  %418 = vmatpush1.msra.mxu0 0.0
  %419 = vmatprep.subr.mxu0 0.0
  %420 = vmatpush1.msra.mxu0 0.0
  %421 = vmatprep.subr.mxu0 0.0
  %422 = vmatpush1.msra.mxu0 0.0
  %423 = vmatprep.subr.mxu0 0.0
  %424 = vmatpush1.msra.mxu0 0.0
  %425 = vmatprep.subr.mxu0 0.0
  %426 = vmatpush1.msra.mxu0 0.0
  %427 = vmatprep.subr.mxu0 0.0
  %428 = vmatpush1.msra.mxu0 0.0
  %429 = vmatprep.subr.mxu0 0.0
  %430 = vmatpush1.msra.mxu0 0.0
  %431 = vmatprep.subr.mxu0 0.0
  %432 = vmatpush1.msra.mxu0 0.0
  %433 = vmatprep.subr.mxu0 0.0
  %434 = vmatpush1.msra.mxu0 0.0
  %435 = vmatprep.subr.mxu0 0.0
  %436 = vmatpush1.msra.mxu0 0.0
  %437 = vmatprep.subr.mxu0 0.0
  %438 = vmatpush1.msra.mxu0 0.0
  %439 = vmatprep.subr.mxu0 0.0
  %440 = vmatpush1.msra.mxu0 0.0
  %441 = vmatprep.subr.mxu0 0.0
  %442 = vmatpush1.msra.mxu0 0.0
  %443 = vmatprep.subr.mxu0 0.0
  %444 = vmatpush1.msra.mxu0 0.0
  %445 = vmatprep.subr.mxu0 0.0
  %446 = vmatpush1.msra.mxu0 0.0
  %447 = vmatprep.subr.mxu0 0.0
  %448 = vmatpush1.msra.mxu0 0.0
  %449 = vmatprep.subr.mxu0 0.0
  %450 = vmatpush1.msra.mxu0 0.0
  %451 = vmatprep.mubr.f32.mxu0 0.0
  %452 = vmatmul.mubr.f32.gmra.mrb[0].mxu0 %v385
  %v453 = vpop.f32.mrb[0].mxu0
  %v454 = vadd.f32 %v41, %v453
  %v455 = vpop.f32.mrb[0].mxu0
  %456 = vdwg.mxu0
  %457 = vmatprep.subr.mxu0 0.0
  %458 = vmatpush1.msra.mxu0 %v20
  %459 = vmatprep.subr.mxu0 0.0
  %460 = vmatpush1.msra.mxu0 %v21
  %461 = vmatprep.subr.mxu0 0.0
  %462 = vmatpush1.msra.mxu0 %v22
  %463 = vmatprep.subr.mxu0 0.0
  %464 = vmatpush1.msra.mxu0 %v23
  %465 = vmatprep.subr.mxu0 0.0
  %466 = vmatpush1.msra.mxu0 %v24
  %467 = vmatprep.subr.mxu0 0.0
  %468 = vmatpush1.msra.mxu0 %v25
  %469 = vmatprep.subr.mxu0 0.0
  %470 = vmatpush1.msra.mxu0 %v26
  %471 = vmatprep.subr.mxu0 0.0
  %472 = vmatpush1.msra.mxu0 %v27
  %473 = vmatprep.subr.mxu0 0.0
  %474 = vmatpush1.msra.mxu0 %v28
  %475 = vmatprep.subr.mxu0 0.0
  %476 = vmatpush1.msra.mxu0 %v29
  %477 = vmatprep.subr.mxu0 0.0
  %478 = vmatpush1.msra.mxu0 %v30
  %479 = vmatprep.subr.mxu0 0.0
  %480 = vmatpush1.msra.mxu0 %v31
  %481 = vmatprep.subr.mxu0 0.0
  %482 = vmatpush1.msra.mxu0 %v32
  %483 = vmatprep.subr.mxu0 0.0
  %484 = vmatpush1.msra.mxu0 %v33
  %485 = vmatprep.subr.mxu0 0.0
  %486 = vmatpush1.msra.mxu0 %v34
  %487 = vmatprep.subr.mxu0 0.0
  %488 = vmatpush1.msra.mxu0 %v35
  %489 = vmatprep.subr.mxu0 0.0
  %490 = vmatpush1.msra.mxu0 0.0
  %491 = vmatprep.subr.mxu0 0.0
  %492 = vmatpush1.msra.mxu0 0.0
  %493 = vmatprep.subr.mxu0 0.0
  %494 = vmatpush1.msra.mxu0 0.0
  %495 = vmatprep.subr.mxu0 0.0
  %496 = vmatpush1.msra.mxu0 0.0
  %497 = vmatprep.subr.mxu0 0.0
  %498 = vmatpush1.msra.mxu0 0.0
  %499 = vmatprep.subr.mxu0 0.0
  %500 = vmatpush1.msra.mxu0 0.0
  %501 = vmatprep.subr.mxu0 0.0
  %502 = vmatpush1.msra.mxu0 0.0
  %503 = vmatprep.subr.mxu0 0.0
  %504 = vmatpush1.msra.mxu0 0.0
  %505 = vmatprep.subr.mxu0 0.0
  %506 = vmatpush1.msra.mxu0 0.0
  %507 = vmatprep.subr.mxu0 0.0
  %508 = vmatpush1.msra.mxu0 0.0
  %509 = vmatprep.subr.mxu0 0.0
  %510 = vmatpush1.msra.mxu0 0.0
  %511 = vmatprep.subr.mxu0 0.0
  %512 = vmatpush1.msra.mxu0 0.0
  %513 = vmatprep.subr.mxu0 0.0
  %514 = vmatpush1.msra.mxu0 0.0
  %515 = vmatprep.subr.mxu0 0.0
  %516 = vmatpush1.msra.mxu0 0.0
  %517 = vmatprep.subr.mxu0 0.0
  %518 = vmatpush1.msra.mxu0 0.0
  %519 = vmatprep.subr.mxu0 0.0
  %520 = vmatpush1.msra.mxu0 0.0
  %521 = vmatprep.mubr.f32.mxu0 0.0
  %522 = vmatmul.mubr.f32.gmra.mrb[0].mxu0 %v454
  %v523 = vpop.f32.mrb[0].mxu0
  %v524 = vadd.f32 0.0, %v523
  %v525 = vpop.f32.mrb[0].mxu0
  %526 = vdwg.mxu0
  %v527 = vsub.f32 %v454, %v524
  %v528 = vmul.f32 %v527, %v527
  %529 = vmatprep.subr.mxu0 0.0
  %530 = vmatpush1.msra.mxu0 %v20
  %531 = vmatprep.subr.mxu0 0.0
  %532 = vmatpush1.msra.mxu0 %v21
  %533 = vmatprep.subr.mxu0 0.0
  %534 = vmatpush1.msra.mxu0 %v22
  %535 = vmatprep.subr.mxu0 0.0
  %536 = vmatpush1.msra.mxu0 %v23
  %537 = vmatprep.subr.mxu0 0.0
  %538 = vmatpush1.msra.mxu0 %v24
  %539 = vmatprep.subr.mxu0 0.0
  %540 = vmatpush1.msra.mxu0 %v25
  %541 = vmatprep.subr.mxu0 0.0
  %542 = vmatpush1.msra.mxu0 %v26
  %543 = vmatprep.subr.mxu0 0.0
  %544 = vmatpush1.msra.mxu0 %v27
  %545 = vmatprep.subr.mxu0 0.0
  %546 = vmatpush1.msra.mxu0 %v28
  %547 = vmatprep.subr.mxu0 0.0
  %548 = vmatpush1.msra.mxu0 %v29
  %549 = vmatprep.subr.mxu0 0.0
  %550 = vmatpush1.msra.mxu0 %v30
  %551 = vmatprep.subr.mxu0 0.0
  %552 = vmatpush1.msra.mxu0 %v31
  %553 = vmatprep.subr.mxu0 0.0
  %554 = vmatpush1.msra.mxu0 %v32
  %555 = vmatprep.subr.mxu0 0.0
  %556 = vmatpush1.msra.mxu0 %v33
  %557 = vmatprep.subr.mxu0 0.0
  %558 = vmatpush1.msra.mxu0 %v34
  %559 = vmatprep.subr.mxu0 0.0
  %560 = vmatpush1.msra.mxu0 %v35
  %561 = vmatprep.subr.mxu0 0.0
  %562 = vmatpush1.msra.mxu0 0.0
  %563 = vmatprep.subr.mxu0 0.0
  %564 = vmatpush1.msra.mxu0 0.0
  %565 = vmatprep.subr.mxu0 0.0
  %566 = vmatpush1.msra.mxu0 0.0
  %567 = vmatprep.subr.mxu0 0.0
  %568 = vmatpush1.msra.mxu0 0.0
  %569 = vmatprep.subr.mxu0 0.0
  %570 = vmatpush1.msra.mxu0 0.0
  %571 = vmatprep.subr.mxu0 0.0
  %572 = vmatpush1.msra.mxu0 0.0
  %573 = vmatprep.subr.mxu0 0.0
  %574 = vmatpush1.msra.mxu0 0.0
  %575 = vmatprep.subr.mxu0 0.0
  %576 = vmatpush1.msra.mxu0 0.0
  %577 = vmatprep.subr.mxu0 0.0
  %578 = vmatpush1.msra.mxu0 0.0
  %579 = vmatprep.subr.mxu0 0.0
  %580 = vmatpush1.msra.mxu0 0.0
  %581 = vmatprep.subr.mxu0 0.0
  %582 = vmatpush1.msra.mxu0 0.0
  %583 = vmatprep.subr.mxu0 0.0
  %584 = vmatpush1.msra.mxu0 0.0
  %585 = vmatprep.subr.mxu0 0.0
  %586 = vmatpush1.msra.mxu0 0.0
  %587 = vmatprep.subr.mxu0 0.0
  %588 = vmatpush1.msra.mxu0 0.0
  %589 = vmatprep.subr.mxu0 0.0
  %590 = vmatpush1.msra.mxu0 0.0
  %591 = vmatprep.subr.mxu0 0.0
  %592 = vmatpush1.msra.mxu0 0.0
  %593 = vmatprep.mubr.f32.mxu0 0.0
  %594 = vmatmul.mubr.f32.gmra.mrb[0].mxu0 %v528
  %v595 = vpop.f32.mrb[0].mxu0
  %v596 = vadd.f32 1e-05, %v595
  %v597 = vpop.f32.mrb[0].mxu0
  %598 = vdwg.mxu0
  %v599 = vrsqrt.pop %v596
  %v600 = vmul.f32 %v527, %v599
  %v601 = vmul.f32 %v600, %v260
  %v602 = vadd.f32 %v601, %v262
  %v603 = vmax.f32 %v602, 0.0
  %v604 = vld [vmem:[%s4 + $0x403] ss:$0 sm:$0xff]
  %v605 = vadd.f32 %v603, %v604
  %v606 = vld [vmem:[%s3 + $0x100] sm:$0xff]
  %v607 = vld [vmem:[%s3 + $0x108] sm:$0xff]
  %v608 = vld [vmem:[%s3 + $0x110] sm:$0xff]
  %v609 = vld [vmem:[%s3 + $0x118] sm:$0xff]
  %v610 = vld [vmem:[%s3 + $0x120] sm:$0xff]
  %v611 = vld [vmem:[%s3 + $0x128] sm:$0xff]
  %v612 = vld [vmem:[%s3 + $0x130] sm:$0xff]
  %v613 = vld [vmem:[%s3 + $0x138] sm:$0xff]
  %v614 = vld [vmem:[%s3 + $0x140] sm:$0xff]
  %v615 = vld [vmem:[%s3 + $0x148] sm:$0xff]
  %v616 = vld [vmem:[%s3 + $0x150] sm:$0xff]
  %v617 = vld [vmem:[%s3 + $0x158] sm:$0xff]
  %v618 = vld [vmem:[%s3 + $0x160] sm:$0xff]
  %v619 = vld [vmem:[%s3 + $0x168] sm:$0xff]
  %v620 = vld [vmem:[%s3 + $0x170] sm:$0xff]
  %v621 = vld [vmem:[%s3 + $0x178] sm:$0xff]
  %v622 = vld [vmem:[%s3 + $0x180] sm:$0xff]
  %v623 = vld [vmem:[%s3 + $0x188] sm:$0xff]
  %v624 = vld [vmem:[%s3 + $0x190] sm:$0xff]
  %v625 = vld [vmem:[%s3 + $0x198] sm:$0xff]
  %v626 = vld [vmem:[%s3 + $0x1a0] sm:$0xff]
  %v627 = vld [vmem:[%s3 + $0x1a8] sm:$0xff]
  %v628 = vld [vmem:[%s3 + $0x1b0] sm:$0xff]
  %v629 = vld [vmem:[%s3 + $0x1b8] sm:$0xff]
  %v630 = vld [vmem:[%s3 + $0x1c0] sm:$0xff]
  %v631 = vld [vmem:[%s3 + $0x1c8] sm:$0xff]
  %v632 = vld [vmem:[%s3 + $0x1d0] sm:$0xff]
  %v633 = vld [vmem:[%s3 + $0x1d8] sm:$0xff]
  %v634 = vld [vmem:[%s3 + $0x1e0] sm:$0xff]
  %v635 = vld [vmem:[%s3 + $0x1e8] sm:$0xff]
  %v636 = vld [vmem:[%s3 + $0x1f0] sm:$0xff]
  %v637 = vld [vmem:[%s3 + $0x1f8] sm:$0xff]
  %s638 = scalar_lea.vmem %s4, 1029
  %v639 = vld [vmem:[%s638] ss:$8 sm:$0x3]
  %v641 = vlaneseq
  %v642 = vshrl.u32 %v641, 7
  %v643 = vsub.s32 0, %v642
  %v644 = vrot.slane %v639, %v643
  %v645 = vlaneseq
  %v646 = vshrl.u32 %v645, 7
  %v647 = vsub.s32 1, %v646
  %v648 = vrot.slane %v639, %v647
  %651 = vmatprep.subr.mxu0 %v607
  %652 = vmatpush1.msra.mxu0 %v606
  %653 = vmatprep.subr.mxu0 %v609
  %654 = vmatpush1.msra.mxu0 %v608
  %655 = vmatprep.subr.mxu0 %v611
  %656 = vmatpush1.msra.mxu0 %v610
  %657 = vmatprep.subr.mxu0 %v613
  %658 = vmatpush1.msra.mxu0 %v612
  %659 = vmatprep.subr.mxu0 %v615
  %660 = vmatpush1.msra.mxu0 %v614
  %661 = vmatprep.subr.mxu0 %v617
  %662 = vmatpush1.msra.mxu0 %v616
  %663 = vmatprep.subr.mxu0 %v619
  %664 = vmatpush1.msra.mxu0 %v618
  %665 = vmatprep.subr.mxu0 %v621
  %666 = vmatpush1.msra.mxu0 %v620
  %667 = vmatprep.subr.mxu0 %v623
  %668 = vmatpush1.msra.mxu0 %v622
  %669 = vmatprep.subr.mxu0 %v625
  %670 = vmatpush1.msra.mxu0 %v624
  %671 = vmatprep.subr.mxu0 %v627
  %672 = vmatpush1.msra.mxu0 %v626
  %673 = vmatprep.subr.mxu0 %v629
  %674 = vmatpush1.msra.mxu0 %v628
  %675 = vmatprep.subr.mxu0 %v631
  %676 = vmatpush1.msra.mxu0 %v630
  %677 = vmatprep.subr.mxu0 %v633
  %678 = vmatpush1.msra.mxu0 %v632
  %679 = vmatprep.subr.mxu0 %v635
  %680 = vmatpush1.msra.mxu0 %v634
  %681 = vmatprep.subr.mxu0 %v637
  %682 = vmatpush1.msra.mxu0 %v636
  %683 = vmatprep.subr.mxu0 0.0
  %684 = vmatpush1.msra.mxu0 0.0
  %685 = vmatprep.subr.mxu0 0.0
  %686 = vmatpush1.msra.mxu0 0.0
  %687 = vmatprep.subr.mxu0 0.0
  %688 = vmatpush1.msra.mxu0 0.0
  %689 = vmatprep.subr.mxu0 0.0
  %690 = vmatpush1.msra.mxu0 0.0
  %691 = vmatprep.subr.mxu0 0.0
  %692 = vmatpush1.msra.mxu0 0.0
  %693 = vmatprep.subr.mxu0 0.0
  %694 = vmatpush1.msra.mxu0 0.0
  %695 = vmatprep.subr.mxu0 0.0
  %696 = vmatpush1.msra.mxu0 0.0
  %697 = vmatprep.subr.mxu0 0.0
  %698 = vmatpush1.msra.mxu0 0.0
  %699 = vmatprep.subr.mxu0 0.0
  %700 = vmatpush1.msra.mxu0 0.0
  %701 = vmatprep.subr.mxu0 0.0
  %702 = vmatpush1.msra.mxu0 0.0
  %703 = vmatprep.subr.mxu0 0.0
  %704 = vmatpush1.msra.mxu0 0.0
  %705 = vmatprep.subr.mxu0 0.0
  %706 = vmatpush1.msra.mxu0 0.0
  %707 = vmatprep.subr.mxu0 0.0
  %708 = vmatpush1.msra.mxu0 0.0
  %709 = vmatprep.subr.mxu0 0.0
  %710 = vmatpush1.msra.mxu0 0.0
  %711 = vmatprep.subr.mxu0 0.0
  %712 = vmatpush1.msra.mxu0 0.0
  %713 = vmatprep.subr.mxu0 0.0
  %714 = vmatpush1.msra.mxu0 0.0
  %715 = vmatprep.mubr.f32.mxu0 0.0
  %716 = vmatmul.mubr.f32.gmra.mrb[0].mxu0 %v605
  %v717 = vpop.f32.mrb[0].mxu0
  %v718 = vadd.f32 %v644, %v717
  %v719 = vpop.f32.mrb[0].mxu0
  %v720 = vadd.f32 %v648, %v719
  %721 = vdwg.mxu0
  %v722 = vlaneseq
  %v723 = vshrl.u32 %v722, 7
  %v724 = vsub.s32 0, %v723
  %v725 = vrot.slane %v718, %v724
  %v726 = vlaneseq
  %v727 = vshrl.u32 %v726, 7
  %v728 = vsub.s32 0, %v727
  %v729 = vrot.slane %v720, %v728
  %v730 = vmul.f32 %v379, %v725
  %v731 = vmul.f32 %v381, %v729
  %v732 = vld [vmem:[%s3 + $0x200] sm:$0xff]
  %v733 = vld [vmem:[%s3 + $0x210] sm:$0xff]
  %v734 = vld [vmem:[%s3 + $0x220] sm:$0xff]
  %v735 = vld [vmem:[%s3 + $0x230] sm:$0xff]
  %v736 = vld [vmem:[%s3 + $0x240] sm:$0xff]
  %v737 = vld [vmem:[%s3 + $0x250] sm:$0xff]
  %v738 = vld [vmem:[%s3 + $0x260] sm:$0xff]
  %v739 = vld [vmem:[%s3 + $0x270] sm:$0xff]
  %v740 = vld [vmem:[%s3 + $0x280] sm:$0xff]
  %v741 = vld [vmem:[%s3 + $0x290] sm:$0xff]
  %v742 = vld [vmem:[%s3 + $0x2a0] sm:$0xff]
  %v743 = vld [vmem:[%s3 + $0x2b0] sm:$0xff]
  %v744 = vld [vmem:[%s3 + $0x2c0] sm:$0xff]
  %v745 = vld [vmem:[%s3 + $0x2d0] sm:$0xff]
  %v746 = vld [vmem:[%s3 + $0x2e0] sm:$0xff]
  %v747 = vld [vmem:[%s3 + $0x2f0] sm:$0xff]
  %v748 = vld [vmem:[%s3 + $0x300] sm:$0xff]
  %v749 = vld [vmem:[%s3 + $0x310] sm:$0xff]
  %v750 = vld [vmem:[%s3 + $0x320] sm:$0xff]
  %v751 = vld [vmem:[%s3 + $0x330] sm:$0xff]
  %v752 = vld [vmem:[%s3 + $0x340] sm:$0xff]
  %v753 = vld [vmem:[%s3 + $0x350] sm:$0xff]
  %v754 = vld [vmem:[%s3 + $0x360] sm:$0xff]
  %v755 = vld [vmem:[%s3 + $0x370] sm:$0xff]
  %v756 = vld [vmem:[%s3 + $0x380] sm:$0xff]
  %v757 = vld [vmem:[%s3 + $0x390] sm:$0xff]
  %v758 = vld [vmem:[%s3 + $0x3a0] sm:$0xff]
  %v759 = vld [vmem:[%s3 + $0x3b0] sm:$0xff]
  %v760 = vld [vmem:[%s3 + $0x3c0] sm:$0xff]
  %v761 = vld [vmem:[%s3 + $0x3d0] sm:$0xff]
  %v762 = vld [vmem:[%s3 + $0x3e0] sm:$0xff]
  %v763 = vld [vmem:[%s3 + $0x3f0] sm:$0xff]
  %764 = vmatprep.subr.mxu0 0.0
  %765 = vmatpush1.msra.mxu0 %v732
  %766 = vmatprep.subr.mxu0 0.0
  %767 = vmatpush1.msra.mxu0 %v733
  %768 = vmatprep.subr.mxu0 0.0
  %769 = vmatpush1.msra.mxu0 %v734
  %770 = vmatprep.subr.mxu0 0.0
  %771 = vmatpush1.msra.mxu0 %v735
  %772 = vmatprep.subr.mxu0 0.0
  %773 = vmatpush1.msra.mxu0 %v736
  %774 = vmatprep.subr.mxu0 0.0
  %775 = vmatpush1.msra.mxu0 %v737
  %776 = vmatprep.subr.mxu0 0.0
  %777 = vmatpush1.msra.mxu0 %v738
  %778 = vmatprep.subr.mxu0 0.0
  %779 = vmatpush1.msra.mxu0 %v739
  %780 = vmatprep.subr.mxu0 0.0
  %781 = vmatpush1.msra.mxu0 %v740
  %782 = vmatprep.subr.mxu0 0.0
  %783 = vmatpush1.msra.mxu0 %v741
  %784 = vmatprep.subr.mxu0 0.0
  %785 = vmatpush1.msra.mxu0 %v742
  %786 = vmatprep.subr.mxu0 0.0
  %787 = vmatpush1.msra.mxu0 %v743
  %788 = vmatprep.subr.mxu0 0.0
  %789 = vmatpush1.msra.mxu0 %v744
  %790 = vmatprep.subr.mxu0 0.0
  %791 = vmatpush1.msra.mxu0 %v745
  %792 = vmatprep.subr.mxu0 0.0
  %793 = vmatpush1.msra.mxu0 %v746
  %794 = vmatprep.subr.mxu0 0.0
  %795 = vmatpush1.msra.mxu0 %v747
  %796 = vmatprep.subr.mxu0 0.0
  %797 = vmatpush1.msra.mxu0 %v748
  %798 = vmatprep.subr.mxu0 0.0
  %799 = vmatpush1.msra.mxu0 %v749
  %800 = vmatprep.subr.mxu0 0.0
  %801 = vmatpush1.msra.mxu0 %v750
  %802 = vmatprep.subr.mxu0 0.0
  %803 = vmatpush1.msra.mxu0 %v751
  %804 = vmatprep.subr.mxu0 0.0
  %805 = vmatpush1.msra.mxu0 %v752
  %806 = vmatprep.subr.mxu0 0.0
  %807 = vmatpush1.msra.mxu0 %v753
  %808 = vmatprep.subr.mxu0 0.0
  %809 = vmatpush1.msra.mxu0 %v754
  %810 = vmatprep.subr.mxu0 0.0
  %811 = vmatpush1.msra.mxu0 %v755
  %812 = vmatprep.subr.mxu0 0.0
  %813 = vmatpush1.msra.mxu0 %v756
  %814 = vmatprep.subr.mxu0 0.0
  %815 = vmatpush1.msra.mxu0 %v757
  %816 = vmatprep.subr.mxu0 0.0
  %817 = vmatpush1.msra.mxu0 %v758
  %818 = vmatprep.subr.mxu0 0.0
  %819 = vmatpush1.msra.mxu0 %v759
  %820 = vmatprep.subr.mxu0 0.0
  %821 = vmatpush1.msra.mxu0 %v760
  %822 = vmatprep.subr.mxu0 0.0
  %823 = vmatpush1.msra.mxu0 %v761
  %824 = vmatprep.subr.mxu0 0.0
  %825 = vmatpush1.msra.mxu0 %v762
  %826 = vmatprep.subr.mxu0 0.0
  %827 = vmatpush1.msra.mxu0 %v763
  %828 = vmatprep.mubr.f32.mxu0 %v731
  %829 = vmatmul.mubr.f32.gmra.mrb[0].mxu0 %v730
  %v830 = vpop.f32.mrb[0].mxu0
  %v831 = vadd.f32 0.0, %v830
  %v832 = vpop.f32.mrb[0].mxu0
  %833 = vdwg.mxu0
  %vm834 = vcmask 130048
  %v835 = vsel %vm834, %v831, -inf
  %v836 = vrot.slane %v835, 4
  %v837 = vmax.f32 %v835, %v836
  %v838 = vrot.slane %v837, 2
  %v839 = vmax.f32 %v837, %v838
  %v840 = vrot.slane %v839, 1
  %v841 = vmax.f32 %v839, %v840
  %v842 = vsub.f32 %v831, %v841
  %v843 = vmul.f32 %v842, 1.442695
  %v844 = vpow.pop %v843
  %v845 = vsel %vm834, %v844, 0.0
  %v846 = vrot.slane %v845, 4
  %v847 = vadd.f32 %v845, %v846
  %v848 = vrot.slane %v847, 2
  %v849 = vadd.f32 %v847, %v848
  %v850 = vrot.slane %v849, 1
  %v851 = vadd.f32 %v849, %v850
  %v852 = vrcp.pop %v851
  %v853 = vmul.f32 %v844, %v852
  %v854 = vld [vmem:[%s3 + $0x400] sm:$0xff]
  %v855 = vld [vmem:[%s3 + $0x408] sm:$0xff]
  %v856 = vld [vmem:[%s3 + $0x410] sm:$0xff]
  %v857 = vld [vmem:[%s3 + $0x418] sm:$0xff]
  %v859 = vsel %vm834, %v853, 0
  %861 = vmatprep.subr.mxu0 %v855
  %862 = vmatpush1.msra.mxu0 %v854
  %863 = vmatprep.subr.mxu0 %v857
  %864 = vmatpush1.msra.mxu0 %v856
  %865 = vmatprep.subr.mxu0 0.0
  %866 = vmatpush1.msra.mxu0 0.0
  %867 = vmatprep.subr.mxu0 0.0
  %868 = vmatpush1.msra.mxu0 0.0
  %869 = vmatprep.subr.mxu0 0.0
  %870 = vmatpush1.msra.mxu0 0.0
  %871 = vmatprep.subr.mxu0 0.0
  %872 = vmatpush1.msra.mxu0 0.0
  %873 = vmatprep.subr.mxu0 0.0
  %874 = vmatpush1.msra.mxu0 0.0
  %875 = vmatprep.subr.mxu0 0.0
  %876 = vmatpush1.msra.mxu0 0.0
  %877 = vmatprep.subr.mxu0 0.0
  %878 = vmatpush1.msra.mxu0 0.0
  %879 = vmatprep.subr.mxu0 0.0
  %880 = vmatpush1.msra.mxu0 0.0
  %881 = vmatprep.subr.mxu0 0.0
  %882 = vmatpush1.msra.mxu0 0.0
  %883 = vmatprep.subr.mxu0 0.0
  %884 = vmatpush1.msra.mxu0 0.0
  %885 = vmatprep.subr.mxu0 0.0
  %886 = vmatpush1.msra.mxu0 0.0
  %887 = vmatprep.subr.mxu0 0.0
  %888 = vmatpush1.msra.mxu0 0.0
  %889 = vmatprep.subr.mxu0 0.0
  %890 = vmatpush1.msra.mxu0 0.0
  %891 = vmatprep.subr.mxu0 0.0
  %892 = vmatpush1.msra.mxu0 0.0
  %893 = vmatprep.subr.mxu0 0.0
  %894 = vmatpush1.msra.mxu0 0.0
  %895 = vmatprep.subr.mxu0 0.0
  %896 = vmatpush1.msra.mxu0 0.0
  %897 = vmatprep.subr.mxu0 0.0
  %898 = vmatpush1.msra.mxu0 0.0
  %899 = vmatprep.subr.mxu0 0.0
  %900 = vmatpush1.msra.mxu0 0.0
  %901 = vmatprep.subr.mxu0 0.0
  %902 = vmatpush1.msra.mxu0 0.0
  %903 = vmatprep.subr.mxu0 0.0
  %904 = vmatpush1.msra.mxu0 0.0
  %905 = vmatprep.subr.mxu0 0.0
  %906 = vmatpush1.msra.mxu0 0.0
  %907 = vmatprep.subr.mxu0 0.0
  %908 = vmatpush1.msra.mxu0 0.0
  %909 = vmatprep.subr.mxu0 0.0
  %910 = vmatpush1.msra.mxu0 0.0
  %911 = vmatprep.subr.mxu0 0.0
  %912 = vmatpush1.msra.mxu0 0.0
  %913 = vmatprep.subr.mxu0 0.0
  %914 = vmatpush1.msra.mxu0 0.0
  %915 = vmatprep.subr.mxu0 0.0
  %916 = vmatpush1.msra.mxu0 0.0
  %917 = vmatprep.subr.mxu0 0.0
  %918 = vmatpush1.msra.mxu0 0.0
  %919 = vmatprep.subr.mxu0 0.0
  %920 = vmatpush1.msra.mxu0 0.0
  %921 = vmatprep.subr.mxu0 0.0
  %922 = vmatpush1.msra.mxu0 0.0
  %923 = vmatprep.subr.mxu0 0.0
  %924 = vmatpush1.msra.mxu0 0.0
  %925 = vmatprep.mubr.f32.mxu0 0.0
  %926 = vmatmul.mubr.f32.gmra.mrb[0].mxu0 %v859
  %v927 = vpop.f32.mrb[0].mxu0
  %v928 = vadd.f32 0.0, %v927
  %v929 = vpop.f32.mrb[0].mxu0
  %v930 = vadd.f32 0.0, %v929
  %931 = vdwg.mxu0
  %v932 = vmul.f32 %v928, %v379
  %v933 = vmul.f32 %v930, %v381
  %v934 = vrot.slane %v932, 4
  %v935 = vadd.f32 %v932, %v934
  %v936 = vrot.slane %v935, 2
  %v937 = vadd.f32 %v935, %v936
  %v938 = vrot.slane %v937, 1
  %v939 = vadd.f32 %v937, %v938
  %v940 = vrot.slane %v933, 4
  %v941 = vadd.f32 %v933, %v940
  %v942 = vrot.slane %v941, 2
  %v943 = vadd.f32 %v941, %v942
  %v944 = vrot.slane %v943, 1
  %v945 = vadd.f32 %v943, %v944
  %v946 = vld [vmem:[%s2 + $0xa0] sm:$0xff]
  %v947 = vld [vmem:[%s2 + $0xa8] sm:$0xff]
  %v948 = vld [vmem:[%s2 + $0xb0] sm:$0xff]
  %v949 = vld [vmem:[%s2 + $0xb8] sm:$0xff]
  %v950 = vld [vmem:[%s2 + $0xc0] sm:$0xff]
  %v951 = vld [vmem:[%s2 + $0xc8] sm:$0xff]
  %v952 = vld [vmem:[%s2 + $0xd0] sm:$0xff]
  %v953 = vld [vmem:[%s2 + $0xd8] sm:$0xff]
  %v954 = vld [vmem:[%s2 + $0xe0] sm:$0xff]
  %v955 = vld [vmem:[%s2 + $0xe8] sm:$0xff]
  %v956 = vld [vmem:[%s2 + $0xf0] sm:$0xff]
  %v957 = vld [vmem:[%s2 + $0xf8] sm:$0xff]
  %v958 = vld [vmem:[%s2 + $0x100] sm:$0xff]
  %v959 = vld [vmem:[%s2 + $0x108] sm:$0xff]
  %v960 = vld [vmem:[%s2 + $0x110] sm:$0xff]
  %v961 = vld [vmem:[%s2 + $0x118] sm:$0xff]
  %v962 = vld [vmem:[%s2 + $0x120] sm:$0xff]
  %v963 = vld [vmem:[%s2 + $0x128] sm:$0xff]
  %v964 = vld [vmem:[%s2 + $0x130] sm:$0xff]
  %v965 = vld [vmem:[%s2 + $0x138] sm:$0xff]
  %v966 = vld [vmem:[%s2 + $0x140] sm:$0xff]
  %v967 = vld [vmem:[%s2 + $0x148] sm:$0xff]
  %v968 = vld [vmem:[%s2 + $0x150] sm:$0xff]
  %v969 = vld [vmem:[%s2 + $0x158] sm:$0xff]
  %v970 = vld [vmem:[%s2 + $0x160] sm:$0xff]
  %v971 = vld [vmem:[%s2 + $0x168] sm:$0xff]
  %v972 = vld [vmem:[%s2 + $0x170] sm:$0xff]
  %v973 = vld [vmem:[%s2 + $0x178] sm:$0xff]
  %v974 = vld [vmem:[%s2 + $0x180] sm:$0xff]
  %v975 = vld [vmem:[%s2 + $0x188] sm:$0xff]
  %v976 = vld [vmem:[%s2 + $0x190] sm:$0xff]
  %v977 = vld [vmem:[%s2 + $0x198] sm:$0xff]
  %v978 = vld [vmem:[%s4 + $0x406] ss:$0 sm:$0xff]
  %979 = vmatprep.subr.mxu0 0.0
  %980 = vmatpush1.msra.mxu0 %v946
  %981 = vmatprep.subr.mxu0 0.0
  %982 = vmatpush1.msra.mxu0 %v947
  %983 = vmatprep.subr.mxu0 0.0
  %984 = vmatpush1.msra.mxu0 %v948
  %985 = vmatprep.subr.mxu0 0.0
  %986 = vmatpush1.msra.mxu0 %v949
  %987 = vmatprep.subr.mxu0 0.0
  %988 = vmatpush1.msra.mxu0 %v950
  %989 = vmatprep.subr.mxu0 0.0
  %990 = vmatpush1.msra.mxu0 %v951
  %991 = vmatprep.subr.mxu0 0.0
  %992 = vmatpush1.msra.mxu0 %v952
  %993 = vmatprep.subr.mxu0 0.0
  %994 = vmatpush1.msra.mxu0 %v953
  %995 = vmatprep.subr.mxu0 0.0
  %996 = vmatpush1.msra.mxu0 %v954
  %997 = vmatprep.subr.mxu0 0.0
  %998 = vmatpush1.msra.mxu0 %v955
  %999 = vmatprep.subr.mxu0 0.0
  %1000 = vmatpush1.msra.mxu0 %v956
  %1001 = vmatprep.subr.mxu0 0.0
  %1002 = vmatpush1.msra.mxu0 %v957
  %1003 = vmatprep.subr.mxu0 0.0
  %1004 = vmatpush1.msra.mxu0 %v958
  %1005 = vmatprep.subr.mxu0 0.0
  %1006 = vmatpush1.msra.mxu0 %v959
  %1007 = vmatprep.subr.mxu0 0.0
  %1008 = vmatpush1.msra.mxu0 %v960
  %1009 = vmatprep.subr.mxu0 0.0
  %1010 = vmatpush1.msra.mxu0 %v961
  %1011 = vmatprep.subr.mxu0 0.0
  %1012 = vmatpush1.msra.mxu0 %v962
  %1013 = vmatprep.subr.mxu0 0.0
  %1014 = vmatpush1.msra.mxu0 %v963
  %1015 = vmatprep.subr.mxu0 0.0
  %1016 = vmatpush1.msra.mxu0 %v964
  %1017 = vmatprep.subr.mxu0 0.0
  %1018 = vmatpush1.msra.mxu0 %v965
  %1019 = vmatprep.subr.mxu0 0.0
  %1020 = vmatpush1.msra.mxu0 %v966
  %1021 = vmatprep.subr.mxu0 0.0
  %1022 = vmatpush1.msra.mxu0 %v967
  %1023 = vmatprep.subr.mxu0 0.0
  %1024 = vmatpush1.msra.mxu0 %v968
  %1025 = vmatprep.subr.mxu0 0.0
  %1026 = vmatpush1.msra.mxu0 %v969
  %1027 = vmatprep.subr.mxu0 0.0
  %1028 = vmatpush1.msra.mxu0 %v970
  %1029 = vmatprep.subr.mxu0 0.0
  %1030 = vmatpush1.msra.mxu0 %v971
  %1031 = vmatprep.subr.mxu0 0.0
  %1032 = vmatpush1.msra.mxu0 %v972
  %1033 = vmatprep.subr.mxu0 0.0
  %1034 = vmatpush1.msra.mxu0 %v973
  %1035 = vmatprep.subr.mxu0 0.0
  %1036 = vmatpush1.msra.mxu0 %v974
  %1037 = vmatprep.subr.mxu0 0.0
  %1038 = vmatpush1.msra.mxu0 %v975
  %1039 = vmatprep.subr.mxu0 0.0
  %1040 = vmatpush1.msra.mxu0 %v976
  %1041 = vmatprep.subr.mxu0 0.0
  %1042 = vmatpush1.msra.mxu0 %v977
  %1043 = vmatprep.mubr.f32.mxu0 %v945
  %1044 = vmatmul.mubr.f32.gmra.mrb[0].mxu0 %v939
  %v1045 = vpop.f32.mrb[0].mxu0
  %v1046 = vadd.f32 %v978, %v1045
  %v1047 = vpop.f32.mrb[0].mxu0
  %1048 = vdwg.mxu0
  %v1049 = vadd.f32 %v605, %v1046
  %1050 = vmatprep.subr.mxu0 0.0
  %1051 = vmatpush1.msra.mxu0 %v20
  %1052 = vmatprep.subr.mxu0 0.0
  %1053 = vmatpush1.msra.mxu0 %v21
  %1054 = vmatprep.subr.mxu0 0.0
  %1055 = vmatpush1.msra.mxu0 %v22
  %1056 = vmatprep.subr.mxu0 0.0
  %1057 = vmatpush1.msra.mxu0 %v23
  %1058 = vmatprep.subr.mxu0 0.0
  %1059 = vmatpush1.msra.mxu0 %v24
  %1060 = vmatprep.subr.mxu0 0.0
  %1061 = vmatpush1.msra.mxu0 %v25
  %1062 = vmatprep.subr.mxu0 0.0
  %1063 = vmatpush1.msra.mxu0 %v26
  %1064 = vmatprep.subr.mxu0 0.0
  %1065 = vmatpush1.msra.mxu0 %v27
  %1066 = vmatprep.subr.mxu0 0.0
  %1067 = vmatpush1.msra.mxu0 %v28
  %1068 = vmatprep.subr.mxu0 0.0
  %1069 = vmatpush1.msra.mxu0 %v29
  %1070 = vmatprep.subr.mxu0 0.0
  %1071 = vmatpush1.msra.mxu0 %v30
  %1072 = vmatprep.subr.mxu0 0.0
  %1073 = vmatpush1.msra.mxu0 %v31
  %1074 = vmatprep.subr.mxu0 0.0
  %1075 = vmatpush1.msra.mxu0 %v32
  %1076 = vmatprep.subr.mxu0 0.0
  %1077 = vmatpush1.msra.mxu0 %v33
  %1078 = vmatprep.subr.mxu0 0.0
  %1079 = vmatpush1.msra.mxu0 %v34
  %1080 = vmatprep.subr.mxu0 0.0
  %1081 = vmatpush1.msra.mxu0 %v35
  %1082 = vmatprep.subr.mxu0 0.0
  %1083 = vmatpush1.msra.mxu0 0.0
  %1084 = vmatprep.subr.mxu0 0.0
  %1085 = vmatpush1.msra.mxu0 0.0
  %1086 = vmatprep.subr.mxu0 0.0
  %1087 = vmatpush1.msra.mxu0 0.0
  %1088 = vmatprep.subr.mxu0 0.0
  %1089 = vmatpush1.msra.mxu0 0.0
  %1090 = vmatprep.subr.mxu0 0.0
  %1091 = vmatpush1.msra.mxu0 0.0
  %1092 = vmatprep.subr.mxu0 0.0
  %1093 = vmatpush1.msra.mxu0 0.0
  %1094 = vmatprep.subr.mxu0 0.0
  %1095 = vmatpush1.msra.mxu0 0.0
  %1096 = vmatprep.subr.mxu0 0.0
  %1097 = vmatpush1.msra.mxu0 0.0
  %1098 = vmatprep.subr.mxu0 0.0
  %1099 = vmatpush1.msra.mxu0 0.0
  %1100 = vmatprep.subr.mxu0 0.0
  %1101 = vmatpush1.msra.mxu0 0.0
  %1102 = vmatprep.subr.mxu0 0.0
  %1103 = vmatpush1.msra.mxu0 0.0
  %1104 = vmatprep.subr.mxu0 0.0
  %1105 = vmatpush1.msra.mxu0 0.0
  %1106 = vmatprep.subr.mxu0 0.0
  %1107 = vmatpush1.msra.mxu0 0.0
  %1108 = vmatprep.subr.mxu0 0.0
  %1109 = vmatpush1.msra.mxu0 0.0
  %1110 = vmatprep.subr.mxu0 0.0
  %1111 = vmatpush1.msra.mxu0 0.0
  %1112 = vmatprep.subr.mxu0 0.0
  %1113 = vmatpush1.msra.mxu0 0.0
  %1114 = vmatprep.mubr.f32.mxu0 0.0
  %1115 = vmatmul.mubr.f32.gmra.mrb[0].mxu0 %v1049
  %v1116 = vpop.f32.mrb[0].mxu0
  %v1117 = vadd.f32 0.0, %v1116
  %v1118 = vpop.f32.mrb[0].mxu0
  %1119 = vdwg.mxu0
  %v1120 = vsub.f32 %v1049, %v1117
  %v1121 = vmul.f32 %v1120, %v1120
  %1122 = vmatprep.subr.mxu0 0.0
  %1123 = vmatpush1.msra.mxu0 %v20
  %1124 = vmatprep.subr.mxu0 0.0
  %1125 = vmatpush1.msra.mxu0 %v21
  %1126 = vmatprep.subr.mxu0 0.0
  %1127 = vmatpush1.msra.mxu0 %v22
  %1128 = vmatprep.subr.mxu0 0.0
  %1129 = vmatpush1.msra.mxu0 %v23
  %1130 = vmatprep.subr.mxu0 0.0
  %1131 = vmatpush1.msra.mxu0 %v24
  %1132 = vmatprep.subr.mxu0 0.0
  %1133 = vmatpush1.msra.mxu0 %v25
  %1134 = vmatprep.subr.mxu0 0.0
  %1135 = vmatpush1.msra.mxu0 %v26
  %1136 = vmatprep.subr.mxu0 0.0
  %1137 = vmatpush1.msra.mxu0 %v27
  %1138 = vmatprep.subr.mxu0 0.0
  %1139 = vmatpush1.msra.mxu0 %v28
  %1140 = vmatprep.subr.mxu0 0.0
  %1141 = vmatpush1.msra.mxu0 %v29
  %1142 = vmatprep.subr.mxu0 0.0
  %1143 = vmatpush1.msra.mxu0 %v30
  %1144 = vmatprep.subr.mxu0 0.0
  %1145 = vmatpush1.msra.mxu0 %v31
  %1146 = vmatprep.subr.mxu0 0.0
  %1147 = vmatpush1.msra.mxu0 %v32
  %1148 = vmatprep.subr.mxu0 0.0
  %1149 = vmatpush1.msra.mxu0 %v33
  %1150 = vmatprep.subr.mxu0 0.0
  %1151 = vmatpush1.msra.mxu0 %v34
  %1152 = vmatprep.subr.mxu0 0.0
  %1153 = vmatpush1.msra.mxu0 %v35
  %1154 = vmatprep.subr.mxu0 0.0
  %1155 = vmatpush1.msra.mxu0 0.0
  %1156 = vmatprep.subr.mxu0 0.0
  %1157 = vmatpush1.msra.mxu0 0.0
  %1158 = vmatprep.subr.mxu0 0.0
  %1159 = vmatpush1.msra.mxu0 0.0
  %1160 = vmatprep.subr.mxu0 0.0
  %1161 = vmatpush1.msra.mxu0 0.0
  %1162 = vmatprep.subr.mxu0 0.0
  %1163 = vmatpush1.msra.mxu0 0.0
  %1164 = vmatprep.subr.mxu0 0.0
  %1165 = vmatpush1.msra.mxu0 0.0
  %1166 = vmatprep.subr.mxu0 0.0
  %1167 = vmatpush1.msra.mxu0 0.0
  %1168 = vmatprep.subr.mxu0 0.0
  %1169 = vmatpush1.msra.mxu0 0.0
  %1170 = vmatprep.subr.mxu0 0.0
  %1171 = vmatpush1.msra.mxu0 0.0
  %1172 = vmatprep.subr.mxu0 0.0
  %1173 = vmatpush1.msra.mxu0 0.0
  %1174 = vmatprep.subr.mxu0 0.0
  %1175 = vmatpush1.msra.mxu0 0.0
  %1176 = vmatprep.subr.mxu0 0.0
  %1177 = vmatpush1.msra.mxu0 0.0
  %1178 = vmatprep.subr.mxu0 0.0
  %1179 = vmatpush1.msra.mxu0 0.0
  %1180 = vmatprep.subr.mxu0 0.0
  %1181 = vmatpush1.msra.mxu0 0.0
  %1182 = vmatprep.subr.mxu0 0.0
  %1183 = vmatpush1.msra.mxu0 0.0
  %1184 = vmatprep.subr.mxu0 0.0
  %1185 = vmatpush1.msra.mxu0 0.0
  %1186 = vmatprep.mubr.f32.mxu0 0.0
  %1187 = vmatmul.mubr.f32.gmra.mrb[0].mxu0 %v1121
  %v1188 = vpop.f32.mrb[0].mxu0
  %v1189 = vadd.f32 1e-05, %v1188
  %v1190 = vpop.f32.mrb[0].mxu0
  %1191 = vdwg.mxu0
  %v1192 = vrsqrt.pop %v1189
  %v1193 = vmul.f32 %v1120, %v1192
  %v1194 = vld [vmem:[%s4 + $0x407] ss:$0 sm:$0xff]
  %v1195 = vmul.f32 %v1193, %v1194
  %v1196 = vld [vmem:[%s4 + $0x420] ss:$0 sm:$0xff]
  %v1197 = vadd.f32 %v1195, %v1196
  %v1198 = vld [vmem:[%s4] sm:$0xff]
  %v1199 = vld [vmem:[%s4 + $0x8] sm:$0xff]
  %v1200 = vld [vmem:[%s4 + $0x10] sm:$0xff]
  %v1201 = vld [vmem:[%s4 + $0x18] sm:$0xff]
  %v1202 = vld [vmem:[%s4 + $0x20] sm:$0xff]
  %v1203 = vld [vmem:[%s4 + $0x28] sm:$0xff]
  %v1204 = vld [vmem:[%s4 + $0x30] sm:$0xff]
  %v1205 = vld [vmem:[%s4 + $0x38] sm:$0xff]
  %v1206 = vld [vmem:[%s4 + $0x40] sm:$0xff]
  %v1207 = vld [vmem:[%s4 + $0x48] sm:$0xff]
  %v1208 = vld [vmem:[%s4 + $0x50] sm:$0xff]
  %v1209 = vld [vmem:[%s4 + $0x58] sm:$0xff]
  %v1210 = vld [vmem:[%s4 + $0x60] sm:$0xff]
  %v1211 = vld [vmem:[%s4 + $0x68] sm:$0xff]
  %v1212 = vld [vmem:[%s4 + $0x70] sm:$0xff]
  %v1213 = vld [vmem:[%s4 + $0x78] sm:$0xff]
  %v1214 = vld [vmem:[%s4 + $0x80] sm:$0xff]
  %v1215 = vld [vmem:[%s4 + $0x88] sm:$0xff]
  %v1216 = vld [vmem:[%s4 + $0x90] sm:$0xff]
  %v1217 = vld [vmem:[%s4 + $0x98] sm:$0xff]
  %v1218 = vld [vmem:[%s4 + $0xa0] sm:$0xff]
  %v1219 = vld [vmem:[%s4 + $0xa8] sm:$0xff]
  %v1220 = vld [vmem:[%s4 + $0xb0] sm:$0xff]
  %v1221 = vld [vmem:[%s4 + $0xb8] sm:$0xff]
  %v1222 = vld [vmem:[%s4 + $0xc0] sm:$0xff]
  %v1223 = vld [vmem:[%s4 + $0xc8] sm:$0xff]
  %v1224 = vld [vmem:[%s4 + $0xd0] sm:$0xff]
  %v1225 = vld [vmem:[%s4 + $0xd8] sm:$0xff]
  %v1226 = vld [vmem:[%s4 + $0xe0] sm:$0xff]
  %v1227 = vld [vmem:[%s4 + $0xe8] sm:$0xff]
  %v1228 = vld [vmem:[%s4 + $0xf0] sm:$0xff]
  %v1229 = vld [vmem:[%s4 + $0xf8] sm:$0xff]
  %v1230 = vld [vmem:[%s4 + $0x100] sm:$0xff]
  %v1231 = vld [vmem:[%s4 + $0x108] sm:$0xff]
  %v1232 = vld [vmem:[%s4 + $0x110] sm:$0xff]
  %v1233 = vld [vmem:[%s4 + $0x118] sm:$0xff]
  %v1234 = vld [vmem:[%s4 + $0x120] sm:$0xff]
  %v1235 = vld [vmem:[%s4 + $0x128] sm:$0xff]
  %v1236 = vld [vmem:[%s4 + $0x130] sm:$0xff]
  %v1237 = vld [vmem:[%s4 + $0x138] sm:$0xff]
  %v1238 = vld [vmem:[%s4 + $0x140] sm:$0xff]
  %v1239 = vld [vmem:[%s4 + $0x148] sm:$0xff]
  %v1240 = vld [vmem:[%s4 + $0x150] sm:$0xff]
  %v1241 = vld [vmem:[%s4 + $0x158] sm:$0xff]
  %v1242 = vld [vmem:[%s4 + $0x160] sm:$0xff]
  %v1243 = vld [vmem:[%s4 + $0x168] sm:$0xff]
  %v1244 = vld [vmem:[%s4 + $0x170] sm:$0xff]
  %v1245 = vld [vmem:[%s4 + $0x178] sm:$0xff]
  %v1246 = vld [vmem:[%s4 + $0x180] sm:$0xff]
  %v1247 = vld [vmem:[%s4 + $0x188] sm:$0xff]
  %v1248 = vld [vmem:[%s4 + $0x190] sm:$0xff]
  %v1249 = vld [vmem:[%s4 + $0x198] sm:$0xff]
  %v1250 = vld [vmem:[%s4 + $0x1a0] sm:$0xff]
  %v1251 = vld [vmem:[%s4 + $0x1a8] sm:$0xff]
  %v1252 = vld [vmem:[%s4 + $0x1b0] sm:$0xff]
  %v1253 = vld [vmem:[%s4 + $0x1b8] sm:$0xff]
  %v1254 = vld [vmem:[%s4 + $0x1c0] sm:$0xff]
  %v1255 = vld [vmem:[%s4 + $0x1c8] sm:$0xff]
  %v1256 = vld [vmem:[%s4 + $0x1d0] sm:$0xff]
  %v1257 = vld [vmem:[%s4 + $0x1d8] sm:$0xff]
  %v1258 = vld [vmem:[%s4 + $0x1e0] sm:$0xff]
  %v1259 = vld [vmem:[%s4 + $0x1e8] sm:$0xff]
  %v1260 = vld [vmem:[%s4 + $0x1f0] sm:$0xff]
  %v1261 = vld [vmem:[%s4 + $0x1f8] sm:$0xff]
  %s1262 = scalar_lea.vmem %s4, 1057
  %v1263 = vld [vmem:[%s1262] ss:$8 sm:$0xf]
  %v1265 = vlaneseq
  %v1266 = vshrl.u32 %v1265, 7
  %v1267 = vsub.s32 0, %v1266
  %v1268 = vrot.slane %v1263, %v1267
  %v1269 = vlaneseq
  %v1270 = vshrl.u32 %v1269, 7
  %v1271 = vsub.s32 1, %v1270
  %v1272 = vrot.slane %v1263, %v1271
  %v1273 = vlaneseq
  %v1274 = vshrl.u32 %v1273, 7
  %v1275 = vsub.s32 2, %v1274
  %v1276 = vrot.slane %v1263, %v1275
  %v1277 = vlaneseq
  %v1278 = vshrl.u32 %v1277, 7
  %v1279 = vsub.s32 3, %v1278
  %v1280 = vrot.slane %v1263, %v1279
  %1285 = vmatprep.subr.mxu0 %v1199
  %1286 = vmatpush1.msra.mxu0 %v1198
  %1287 = vmatprep.subr.mxu0 %v1203
  %1288 = vmatpush1.msra.mxu0 %v1202
  %1289 = vmatprep.subr.mxu0 %v1207
  %1290 = vmatpush1.msra.mxu0 %v1206
  %1291 = vmatprep.subr.mxu0 %v1211
  %1292 = vmatpush1.msra.mxu0 %v1210
  %1293 = vmatprep.subr.mxu0 %v1215
  %1294 = vmatpush1.msra.mxu0 %v1214
  %1295 = vmatprep.subr.mxu0 %v1219
  %1296 = vmatpush1.msra.mxu0 %v1218
  %1297 = vmatprep.subr.mxu0 %v1223
  %1298 = vmatpush1.msra.mxu0 %v1222
  %1299 = vmatprep.subr.mxu0 %v1227
  %1300 = vmatpush1.msra.mxu0 %v1226
  %1301 = vmatprep.subr.mxu0 %v1231
  %1302 = vmatpush1.msra.mxu0 %v1230
  %1303 = vmatprep.subr.mxu0 %v1235
  %1304 = vmatpush1.msra.mxu0 %v1234
  %1305 = vmatprep.subr.mxu0 %v1239
  %1306 = vmatpush1.msra.mxu0 %v1238
  %1307 = vmatprep.subr.mxu0 %v1243
  %1308 = vmatpush1.msra.mxu0 %v1242
  %1309 = vmatprep.subr.mxu0 %v1247
  %1310 = vmatpush1.msra.mxu0 %v1246
  %1311 = vmatprep.subr.mxu0 %v1251
  %1312 = vmatpush1.msra.mxu0 %v1250
  %1313 = vmatprep.subr.mxu0 %v1255
  %1314 = vmatpush1.msra.mxu0 %v1254
  %1315 = vmatprep.subr.mxu0 %v1259
  %1316 = vmatpush1.msra.mxu0 %v1258
  %1317 = vmatprep.subr.mxu0 0.0
  %1318 = vmatpush1.msra.mxu0 0.0
  %1319 = vmatprep.subr.mxu0 0.0
  %1320 = vmatpush1.msra.mxu0 0.0
  %1321 = vmatprep.subr.mxu0 0.0
  %1322 = vmatpush1.msra.mxu0 0.0
  %1323 = vmatprep.subr.mxu0 0.0
  %1324 = vmatpush1.msra.mxu0 0.0
  %1325 = vmatprep.subr.mxu0 0.0
  %1326 = vmatpush1.msra.mxu0 0.0
  %1327 = vmatprep.subr.mxu0 0.0
  %1328 = vmatpush1.msra.mxu0 0.0
  %1329 = vmatprep.subr.mxu0 0.0
  %1330 = vmatpush1.msra.mxu0 0.0
  %1331 = vmatprep.subr.mxu0 0.0
  %1332 = vmatpush1.msra.mxu0 0.0
  %1333 = vmatprep.subr.mxu0 0.0
  %1334 = vmatpush1.msra.mxu0 0.0
  %1335 = vmatprep.subr.mxu0 0.0
  %1336 = vmatpush1.msra.mxu0 0.0
  %1337 = vmatprep.subr.mxu0 0.0
  %1338 = vmatpush1.msra.mxu0 0.0
  %1339 = vmatprep.subr.mxu0 0.0
  %1340 = vmatpush1.msra.mxu0 0.0
  %1341 = vmatprep.subr.mxu0 0.0
  %1342 = vmatpush1.msra.mxu0 0.0
  %1343 = vmatprep.subr.mxu0 0.0
  %1344 = vmatpush1.msra.mxu0 0.0
  %1345 = vmatprep.subr.mxu0 0.0
  %1346 = vmatpush1.msra.mxu0 0.0
  %1347 = vmatprep.subr.mxu0 0.0
  %1348 = vmatpush1.msra.mxu0 0.0
  %1349 = vmatprep.mubr.f32.mxu0 0.0
  %1350 = vmatmul.mubr.f32.gmra.mrb[0].mxu0 %v1197
  %v1351 = vpop.f32.mrb[0].mxu0
  %v1352 = vadd.f32 %v1268, %v1351
  %v1353 = vpop.f32.mrb[0].mxu0
  %v1354 = vadd.f32 %v1272, %v1353
  %1355 = vdwg.mxu0
  %1356 = vmatprep.subr.mxu0 %v1201
  %1357 = vmatpush1.msra.mxu0 %v1200
  %1358 = vmatprep.subr.mxu0 %v1205
  %1359 = vmatpush1.msra.mxu0 %v1204
  %1360 = vmatprep.subr.mxu0 %v1209
  %1361 = vmatpush1.msra.mxu0 %v1208
  %1362 = vmatprep.subr.mxu0 %v1213
  %1363 = vmatpush1.msra.mxu0 %v1212
  %1364 = vmatprep.subr.mxu0 %v1217
  %1365 = vmatpush1.msra.mxu0 %v1216
  %1366 = vmatprep.subr.mxu0 %v1221
  %1367 = vmatpush1.msra.mxu0 %v1220
  %1368 = vmatprep.subr.mxu0 %v1225
  %1369 = vmatpush1.msra.mxu0 %v1224
  %1370 = vmatprep.subr.mxu0 %v1229
  %1371 = vmatpush1.msra.mxu0 %v1228
  %1372 = vmatprep.subr.mxu0 %v1233
  %1373 = vmatpush1.msra.mxu0 %v1232
  %1374 = vmatprep.subr.mxu0 %v1237
  %1375 = vmatpush1.msra.mxu0 %v1236
  %1376 = vmatprep.subr.mxu0 %v1241
  %1377 = vmatpush1.msra.mxu0 %v1240
  %1378 = vmatprep.subr.mxu0 %v1245
  %1379 = vmatpush1.msra.mxu0 %v1244
  %1380 = vmatprep.subr.mxu0 %v1249
  %1381 = vmatpush1.msra.mxu0 %v1248
  %1382 = vmatprep.subr.mxu0 %v1253
  %1383 = vmatpush1.msra.mxu0 %v1252
  %1384 = vmatprep.subr.mxu0 %v1257
  %1385 = vmatpush1.msra.mxu0 %v1256
  %1386 = vmatprep.subr.mxu0 %v1261
  %1387 = vmatpush1.msra.mxu0 %v1260
  %1388 = vmatprep.subr.mxu0 0.0
  %1389 = vmatpush1.msra.mxu0 0.0
  %1390 = vmatprep.subr.mxu0 0.0
  %1391 = vmatpush1.msra.mxu0 0.0
  %1392 = vmatprep.subr.mxu0 0.0
  %1393 = vmatpush1.msra.mxu0 0.0
  %1394 = vmatprep.subr.mxu0 0.0
  %1395 = vmatpush1.msra.mxu0 0.0
  %1396 = vmatprep.subr.mxu0 0.0
  %1397 = vmatpush1.msra.mxu0 0.0
  %1398 = vmatprep.subr.mxu0 0.0
  %1399 = vmatpush1.msra.mxu0 0.0
  %1400 = vmatprep.subr.mxu0 0.0
  %1401 = vmatpush1.msra.mxu0 0.0
  %1402 = vmatprep.subr.mxu0 0.0
  %1403 = vmatpush1.msra.mxu0 0.0
  %1404 = vmatprep.subr.mxu0 0.0
  %1405 = vmatpush1.msra.mxu0 0.0
  %1406 = vmatprep.subr.mxu0 0.0
  %1407 = vmatpush1.msra.mxu0 0.0
  %1408 = vmatprep.subr.mxu0 0.0
  %1409 = vmatpush1.msra.mxu0 0.0
  %1410 = vmatprep.subr.mxu0 0.0
  %1411 = vmatpush1.msra.mxu0 0.0
  %1412 = vmatprep.subr.mxu0 0.0
  %1413 = vmatpush1.msra.mxu0 0.0
  %1414 = vmatprep.subr.mxu0 0.0
  %1415 = vmatpush1.msra.mxu0 0.0
  %1416 = vmatprep.subr.mxu0 0.0
  %1417 = vmatpush1.msra.mxu0 0.0
  %1418 = vmatprep.subr.mxu0 0.0
  %1419 = vmatpush1.msra.mxu0 0.0
  %1420 = vmatprep.mubr.f32.mxu0 0.0
  %1421 = vmatmul.mubr.f32.gmra.mrb[0].mxu0 %v1197
  %v1422 = vpop.f32.mrb[0].mxu0
  %v1423 = vadd.f32 %v1276, %v1422
  %v1424 = vpop.f32.mrb[0].mxu0
  %v1425 = vadd.f32 %v1280, %v1424
  %1426 = vdwg.mxu0
  %v1427 = vmul.f32 %v1352, 0.5
  %v1428 = vmul.f32 %v1354, 0.5
  %v1429 = vmul.f32 %v1423, 0.5
  %v1430 = vmul.f32 %v1425, 0.5
  %v1431 = vmul.f32 %v1352, 0.70710677
  %v1432 = vmul.f32 %v1354, 0.70710677
  %v1433 = vmul.f32 %v1423, 0.70710677
  %v1434 = vmul.f32 %v1425, 0.70710677
  %v1435 = vand.u32 2147483647, %v1431
  %v1436 = vand.u32 2147483647, %v1432
  %v1437 = vand.u32 2147483647, %v1433
  %v1438 = vand.u32 2147483647, %v1434
  %v1439 = vmul.f32 %v1435, 0.3275911
  %v1440 = vmul.f32 %v1436, 0.3275911
  %v1441 = vmul.f32 %v1437, 0.3275911
  %v1442 = vmul.f32 %v1438, 0.3275911
  %v1443 = vadd.f32 %v1439, 1.0
  %v1444 = vadd.f32 %v1440, 1.0
  %v1445 = vadd.f32 %v1441, 1.0
  %v1446 = vadd.f32 %v1442, 1.0
  %v1447 = vrcp.pop %v1443
  %v1448 = vmul.f32 1.0, %v1447
  %v1449 = vrcp.pop %v1444
  %v1450 = vmul.f32 1.0, %v1449
  %v1451 = vrcp.pop %v1445
  %v1452 = vmul.f32 1.0, %v1451
  %v1453 = vrcp.pop %v1446
  %v1454 = vmul.f32 1.0, %v1453
  %v1455 = vmul.f32 %v1448, 1.0614054
  %v1456 = vmul.f32 %v1450, 1.0614054
  %v1457 = vmul.f32 %v1452, 1.0614054
  %v1458 = vmul.f32 %v1454, 1.0614054
  %v1459 = vadd.f32 %v1455, -1.4531521
  %v1460 = vadd.f32 %v1456, -1.4531521
  %v1461 = vadd.f32 %v1457, -1.4531521
  %v1462 = vadd.f32 %v1458, -1.4531521
  %v1463 = vmul.f32 %v1459, %v1448
  %v1464 = vmul.f32 %v1460, %v1450
  %v1465 = vmul.f32 %v1461, %v1452
  %v1466 = vmul.f32 %v1462, %v1454
  %v1467 = vadd.f32 %v1463, 1.4214138
  %v1468 = vadd.f32 %v1464, 1.4214138
  %v1469 = vadd.f32 %v1465, 1.4214138
  %v1470 = vadd.f32 %v1466, 1.4214138
  %v1471 = vmul.f32 %v1467, %v1448
  %v1472 = vmul.f32 %v1468, %v1450
  %v1473 = vmul.f32 %v1469, %v1452
  %v1474 = vmul.f32 %v1470, %v1454
  %v1475 = vadd.f32 %v1471, -0.28449672
  %v1476 = vadd.f32 %v1472, -0.28449672
  %v1477 = vadd.f32 %v1473, -0.28449672
  %v1478 = vadd.f32 %v1474, -0.28449672
  %v1479 = vmul.f32 %v1475, %v1448
  %v1480 = vmul.f32 %v1476, %v1450
  %v1481 = vmul.f32 %v1477, %v1452
  %v1482 = vmul.f32 %v1478, %v1454
  %v1483 = vadd.f32 %v1479, 0.2548296
  %v1484 = vadd.f32 %v1480, 0.2548296
  %v1485 = vadd.f32 %v1481, 0.2548296
  %v1486 = vadd.f32 %v1482, 0.2548296
  %v1487 = vmul.f32 %v1483, %v1448
  %v1488 = vmul.f32 %v1484, %v1450
  %v1489 = vmul.f32 %v1485, %v1452
  %v1490 = vmul.f32 %v1486, %v1454
  %v1491 = vsub.f32 0.0, %v1435
  %v1492 = vsub.f32 0.0, %v1436
  %v1493 = vsub.f32 0.0, %v1437
  %v1494 = vsub.f32 0.0, %v1438
  %v1495 = vmul.f32 %v1491, %v1435
  %v1496 = vmul.f32 %v1492, %v1436
  %v1497 = vmul.f32 %v1493, %v1437
  %v1498 = vmul.f32 %v1494, %v1438
  %v1499 = vmul.f32 %v1495, 1.442695
  %v1500 = vpow.pop %v1499
  %v1501 = vmul.f32 %v1496, 1.442695
  %v1502 = vpow.pop %v1501
  %v1503 = vmul.f32 %v1497, 1.442695
  %v1504 = vpow.pop %v1503
  %v1505 = vmul.f32 %v1498, 1.442695
  %v1506 = vpow.pop %v1505
  %v1507 = vmul.f32 %v1487, %v1500
  %v1508 = vmul.f32 %v1488, %v1502
  %v1509 = vmul.f32 %v1489, %v1504
  %v1510 = vmul.f32 %v1490, %v1506
  %v1511 = vsub.f32 1.0, %v1507
  %v1512 = vsub.f32 1.0, %v1508
  %v1513 = vsub.f32 1.0, %v1509
  %v1514 = vsub.f32 1.0, %v1510
  %vm1515 = vcmp.ge.f32.partialorder %v1431, 0.0
  %vm1516 = vcmp.ge.f32.partialorder %v1432, 0.0
  %vm1517 = vcmp.ge.f32.partialorder %v1433, 0.0
  %vm1518 = vcmp.ge.f32.partialorder %v1434, 0.0
  %v1519 = vsub.f32 0.0, %v1511
  %v1520 = vsub.f32 0.0, %v1512
  %v1521 = vsub.f32 0.0, %v1513
  %v1522 = vsub.f32 0.0, %v1514
  %v1523 = vsel %vm1515, %v1511, %v1519
  %v1524 = vsel %vm1516, %v1512, %v1520
  %v1525 = vsel %vm1517, %v1513, %v1521
  %v1526 = vsel %vm1518, %v1514, %v1522
  %v1527 = vadd.f32 %v1523, 1.0
  %v1528 = vadd.f32 %v1524, 1.0
  %v1529 = vadd.f32 %v1525, 1.0
  %v1530 = vadd.f32 %v1526, 1.0
  %v1531 = vmul.f32 %v1427, %v1527
  %v1532 = vmul.f32 %v1428, %v1528
  %v1533 = vmul.f32 %v1429, %v1529
  %v1534 = vmul.f32 %v1430, %v1530
  %v1535 = vld [vmem:[%s2 + $0x1a0] sm:$0xff]
  %v1536 = vld [vmem:[%s2 + $0x1a8] sm:$0xff]
  %v1537 = vld [vmem:[%s2 + $0x1b0] sm:$0xff]
  %v1538 = vld [vmem:[%s2 + $0x1b8] sm:$0xff]
  %v1539 = vld [vmem:[%s2 + $0x1c0] sm:$0xff]
  %v1540 = vld [vmem:[%s2 + $0x1c8] sm:$0xff]
  %v1541 = vld [vmem:[%s2 + $0x1d0] sm:$0xff]
  %v1542 = vld [vmem:[%s2 + $0x1d8] sm:$0xff]
  %v1543 = vld [vmem:[%s2 + $0x1e0] sm:$0xff]
  %v1544 = vld [vmem:[%s2 + $0x1e8] sm:$0xff]
  %v1545 = vld [vmem:[%s2 + $0x1f0] sm:$0xff]
  %v1546 = vld [vmem:[%s2 + $0x1f8] sm:$0xff]
  %v1547 = vld [vmem:[%s2 + $0x200] sm:$0xff]
  %v1548 = vld [vmem:[%s2 + $0x208] sm:$0xff]
  %v1549 = vld [vmem:[%s2 + $0x210] sm:$0xff]
  %v1550 = vld [vmem:[%s2 + $0x218] sm:$0xff]
  %v1551 = vld [vmem:[%s2 + $0x220] sm:$0xff]
  %v1552 = vld [vmem:[%s2 + $0x228] sm:$0xff]
  %v1553 = vld [vmem:[%s2 + $0x230] sm:$0xff]
  %v1554 = vld [vmem:[%s2 + $0x238] sm:$0xff]
  %v1555 = vld [vmem:[%s2 + $0x240] sm:$0xff]
  %v1556 = vld [vmem:[%s2 + $0x248] sm:$0xff]
  %v1557 = vld [vmem:[%s2 + $0x250] sm:$0xff]
  %v1558 = vld [vmem:[%s2 + $0x258] sm:$0xff]
  %v1559 = vld [vmem:[%s2 + $0x260] sm:$0xff]
  %v1560 = vld [vmem:[%s2 + $0x268] sm:$0xff]
  %v1561 = vld [vmem:[%s2 + $0x270] sm:$0xff]
  %v1562 = vld [vmem:[%s2 + $0x278] sm:$0xff]
  %v1563 = vld [vmem:[%s2 + $0x280] sm:$0xff]
  %v1564 = vld [vmem:[%s2 + $0x288] sm:$0xff]
  %v1565 = vld [vmem:[%s2 + $0x290] sm:$0xff]
  %v1566 = vld [vmem:[%s2 + $0x298] sm:$0xff]
  %v1567 = vld [vmem:[%s2 + $0x2a0] sm:$0xff]
  %v1568 = vld [vmem:[%s2 + $0x2a8] sm:$0xff]
  %v1569 = vld [vmem:[%s2 + $0x2b0] sm:$0xff]
  %v1570 = vld [vmem:[%s2 + $0x2b8] sm:$0xff]
  %v1571 = vld [vmem:[%s2 + $0x2c0] sm:$0xff]
  %v1572 = vld [vmem:[%s2 + $0x2c8] sm:$0xff]
  %v1573 = vld [vmem:[%s2 + $0x2d0] sm:$0xff]
  %v1574 = vld [vmem:[%s2 + $0x2d8] sm:$0xff]
  %v1575 = vld [vmem:[%s2 + $0x2e0] sm:$0xff]
  %v1576 = vld [vmem:[%s2 + $0x2e8] sm:$0xff]
  %v1577 = vld [vmem:[%s2 + $0x2f0] sm:$0xff]
  %v1578 = vld [vmem:[%s2 + $0x2f8] sm:$0xff]
  %v1579 = vld [vmem:[%s2 + $0x300] sm:$0xff]
  %v1580 = vld [vmem:[%s2 + $0x308] sm:$0xff]
  %v1581 = vld [vmem:[%s2 + $0x310] sm:$0xff]
  %v1582 = vld [vmem:[%s2 + $0x318] sm:$0xff]
  %v1583 = vld [vmem:[%s2 + $0x320] sm:$0xff]
  %v1584 = vld [vmem:[%s2 + $0x328] sm:$0xff]
  %v1585 = vld [vmem:[%s2 + $0x330] sm:$0xff]
  %v1586 = vld [vmem:[%s2 + $0x338] sm:$0xff]
  %v1587 = vld [vmem:[%s2 + $0x340] sm:$0xff]
  %v1588 = vld [vmem:[%s2 + $0x348] sm:$0xff]
  %v1589 = vld [vmem:[%s2 + $0x350] sm:$0xff]
  %v1590 = vld [vmem:[%s2 + $0x358] sm:$0xff]
  %v1591 = vld [vmem:[%s2 + $0x360] sm:$0xff]
  %v1592 = vld [vmem:[%s2 + $0x368] sm:$0xff]
  %v1593 = vld [vmem:[%s2 + $0x370] sm:$0xff]
  %v1594 = vld [vmem:[%s2 + $0x378] sm:$0xff]
  %v1595 = vld [vmem:[%s2 + $0x380] sm:$0xff]
  %v1596 = vld [vmem:[%s2 + $0x388] sm:$0xff]
  %v1597 = vld [vmem:[%s2 + $0x390] sm:$0xff]
  %v1598 = vld [vmem:[%s2 + $0x398] sm:$0xff]
  %v1599 = vld [vmem:[%s4 + $0x422] ss:$0 sm:$0xff]
  %1600 = vmatprep.subr.mxu0 0.0
  %1601 = vmatpush1.msra.mxu0 %v1535
  %1602 = vmatprep.subr.mxu0 0.0
  %1603 = vmatpush1.msra.mxu0 %v1536
  %1604 = vmatprep.subr.mxu0 0.0
  %1605 = vmatpush1.msra.mxu0 %v1537
  %1606 = vmatprep.subr.mxu0 0.0
  %1607 = vmatpush1.msra.mxu0 %v1538
  %1608 = vmatprep.subr.mxu0 0.0
  %1609 = vmatpush1.msra.mxu0 %v1539
  %1610 = vmatprep.subr.mxu0 0.0
  %1611 = vmatpush1.msra.mxu0 %v1540
  %1612 = vmatprep.subr.mxu0 0.0
  %1613 = vmatpush1.msra.mxu0 %v1541
  %1614 = vmatprep.subr.mxu0 0.0
  %1615 = vmatpush1.msra.mxu0 %v1542
  %1616 = vmatprep.subr.mxu0 0.0
  %1617 = vmatpush1.msra.mxu0 %v1543
  %1618 = vmatprep.subr.mxu0 0.0
  %1619 = vmatpush1.msra.mxu0 %v1544
  %1620 = vmatprep.subr.mxu0 0.0
  %1621 = vmatpush1.msra.mxu0 %v1545
  %1622 = vmatprep.subr.mxu0 0.0
  %1623 = vmatpush1.msra.mxu0 %v1546
  %1624 = vmatprep.subr.mxu0 0.0
  %1625 = vmatpush1.msra.mxu0 %v1547
  %1626 = vmatprep.subr.mxu0 0.0
  %1627 = vmatpush1.msra.mxu0 %v1548
  %1628 = vmatprep.subr.mxu0 0.0
  %1629 = vmatpush1.msra.mxu0 %v1549
  %1630 = vmatprep.subr.mxu0 0.0
  %1631 = vmatpush1.msra.mxu0 %v1550
  %1632 = vmatprep.subr.mxu0 0.0
  %1633 = vmatpush1.msra.mxu0 %v1551
  %1634 = vmatprep.subr.mxu0 0.0
  %1635 = vmatpush1.msra.mxu0 %v1552
  %1636 = vmatprep.subr.mxu0 0.0
  %1637 = vmatpush1.msra.mxu0 %v1553
  %1638 = vmatprep.subr.mxu0 0.0
  %1639 = vmatpush1.msra.mxu0 %v1554
  %1640 = vmatprep.subr.mxu0 0.0
  %1641 = vmatpush1.msra.mxu0 %v1555
  %1642 = vmatprep.subr.mxu0 0.0
  %1643 = vmatpush1.msra.mxu0 %v1556
  %1644 = vmatprep.subr.mxu0 0.0
  %1645 = vmatpush1.msra.mxu0 %v1557
  %1646 = vmatprep.subr.mxu0 0.0
  %1647 = vmatpush1.msra.mxu0 %v1558
  %1648 = vmatprep.subr.mxu0 0.0
  %1649 = vmatpush1.msra.mxu0 %v1559
  %1650 = vmatprep.subr.mxu0 0.0
  %1651 = vmatpush1.msra.mxu0 %v1560
  %1652 = vmatprep.subr.mxu0 0.0
  %1653 = vmatpush1.msra.mxu0 %v1561
  %1654 = vmatprep.subr.mxu0 0.0
  %1655 = vmatpush1.msra.mxu0 %v1562
  %1656 = vmatprep.subr.mxu0 0.0
  %1657 = vmatpush1.msra.mxu0 %v1563
  %1658 = vmatprep.subr.mxu0 0.0
  %1659 = vmatpush1.msra.mxu0 %v1564
  %1660 = vmatprep.subr.mxu0 0.0
  %1661 = vmatpush1.msra.mxu0 %v1565
  %1662 = vmatprep.subr.mxu0 0.0
  %1663 = vmatpush1.msra.mxu0 %v1566
  %1664 = vmatprep.mubr.f32.mxu0 %v1532
  %1665 = vmatmul.mubr.f32.gmra.mrb[0].mxu0 %v1531
  %v1666 = vpop.f32.mrb[0].mxu0
  %v1667 = vadd.f32 %v1599, %v1666
  %v1668 = vpop.f32.mrb[0].mxu0
  %1669 = vdwg.mxu0
  %1670 = vmatprep.subr.mxu0 0.0
  %1671 = vmatpush1.msra.mxu0 %v1567
  %1672 = vmatprep.subr.mxu0 0.0
  %1673 = vmatpush1.msra.mxu0 %v1568
  %1674 = vmatprep.subr.mxu0 0.0
  %1675 = vmatpush1.msra.mxu0 %v1569
  %1676 = vmatprep.subr.mxu0 0.0
  %1677 = vmatpush1.msra.mxu0 %v1570
  %1678 = vmatprep.subr.mxu0 0.0
  %1679 = vmatpush1.msra.mxu0 %v1571
  %1680 = vmatprep.subr.mxu0 0.0
  %1681 = vmatpush1.msra.mxu0 %v1572
  %1682 = vmatprep.subr.mxu0 0.0
  %1683 = vmatpush1.msra.mxu0 %v1573
  %1684 = vmatprep.subr.mxu0 0.0
  %1685 = vmatpush1.msra.mxu0 %v1574
  %1686 = vmatprep.subr.mxu0 0.0
  %1687 = vmatpush1.msra.mxu0 %v1575
  %1688 = vmatprep.subr.mxu0 0.0
  %1689 = vmatpush1.msra.mxu0 %v1576
  %1690 = vmatprep.subr.mxu0 0.0
  %1691 = vmatpush1.msra.mxu0 %v1577
  %1692 = vmatprep.subr.mxu0 0.0
  %1693 = vmatpush1.msra.mxu0 %v1578
  %1694 = vmatprep.subr.mxu0 0.0
  %1695 = vmatpush1.msra.mxu0 %v1579
  %1696 = vmatprep.subr.mxu0 0.0
  %1697 = vmatpush1.msra.mxu0 %v1580
  %1698 = vmatprep.subr.mxu0 0.0
  %1699 = vmatpush1.msra.mxu0 %v1581
  %1700 = vmatprep.subr.mxu0 0.0
  %1701 = vmatpush1.msra.mxu0 %v1582
  %1702 = vmatprep.subr.mxu0 0.0
  %1703 = vmatpush1.msra.mxu0 %v1583
  %1704 = vmatprep.subr.mxu0 0.0
  %1705 = vmatpush1.msra.mxu0 %v1584
  %1706 = vmatprep.subr.mxu0 0.0
  %1707 = vmatpush1.msra.mxu0 %v1585
  %1708 = vmatprep.subr.mxu0 0.0
  %1709 = vmatpush1.msra.mxu0 %v1586
  %1710 = vmatprep.subr.mxu0 0.0
  %1711 = vmatpush1.msra.mxu0 %v1587
  %1712 = vmatprep.subr.mxu0 0.0
  %1713 = vmatpush1.msra.mxu0 %v1588
  %1714 = vmatprep.subr.mxu0 0.0
  %1715 = vmatpush1.msra.mxu0 %v1589
  %1716 = vmatprep.subr.mxu0 0.0
  %1717 = vmatpush1.msra.mxu0 %v1590
  %1718 = vmatprep.subr.mxu0 0.0
  %1719 = vmatpush1.msra.mxu0 %v1591
  %1720 = vmatprep.subr.mxu0 0.0
  %1721 = vmatpush1.msra.mxu0 %v1592
  %1722 = vmatprep.subr.mxu0 0.0
  %1723 = vmatpush1.msra.mxu0 %v1593
  %1724 = vmatprep.subr.mxu0 0.0
  %1725 = vmatpush1.msra.mxu0 %v1594
  %1726 = vmatprep.subr.mxu0 0.0
  %1727 = vmatpush1.msra.mxu0 %v1595
  %1728 = vmatprep.subr.mxu0 0.0
  %1729 = vmatpush1.msra.mxu0 %v1596
  %1730 = vmatprep.subr.mxu0 0.0
  %1731 = vmatpush1.msra.mxu0 %v1597
  %1732 = vmatprep.subr.mxu0 0.0
  %1733 = vmatpush1.msra.mxu0 %v1598
  %1734 = vmatprep.mubr.f32.mxu0 %v1534
  %1735 = vmatmul.mubr.f32.gmra.mrb[0].mxu0 %v1533
  %v1736 = vpop.f32.mrb[0].mxu0
  %v1737 = vadd.f32 %v1667, %v1736
  %v1738 = vpop.f32.mrb[0].mxu0
  %1739 = vdwg.mxu0
  %v1740 = vadd.f32 %v1197, %v1737
  %1741 = vmatprep.subr.mxu0 0.0
  %1742 = vmatpush1.msra.mxu0 %v20
  %1743 = vmatprep.subr.mxu0 0.0
  %1744 = vmatpush1.msra.mxu0 %v21
  %1745 = vmatprep.subr.mxu0 0.0
  %1746 = vmatpush1.msra.mxu0 %v22
  %1747 = vmatprep.subr.mxu0 0.0
  %1748 = vmatpush1.msra.mxu0 %v23
  %1749 = vmatprep.subr.mxu0 0.0
  %1750 = vmatpush1.msra.mxu0 %v24
  %1751 = vmatprep.subr.mxu0 0.0
  %1752 = vmatpush1.msra.mxu0 %v25
  %1753 = vmatprep.subr.mxu0 0.0
  %1754 = vmatpush1.msra.mxu0 %v26
  %1755 = vmatprep.subr.mxu0 0.0
  %1756 = vmatpush1.msra.mxu0 %v27
  %1757 = vmatprep.subr.mxu0 0.0
  %1758 = vmatpush1.msra.mxu0 %v28
  %1759 = vmatprep.subr.mxu0 0.0
  %1760 = vmatpush1.msra.mxu0 %v29
  %1761 = vmatprep.subr.mxu0 0.0
  %1762 = vmatpush1.msra.mxu0 %v30
  %1763 = vmatprep.subr.mxu0 0.0
  %1764 = vmatpush1.msra.mxu0 %v31
  %1765 = vmatprep.subr.mxu0 0.0
  %1766 = vmatpush1.msra.mxu0 %v32
  %1767 = vmatprep.subr.mxu0 0.0
  %1768 = vmatpush1.msra.mxu0 %v33
  %1769 = vmatprep.subr.mxu0 0.0
  %1770 = vmatpush1.msra.mxu0 %v34
  %1771 = vmatprep.subr.mxu0 0.0
  %1772 = vmatpush1.msra.mxu0 %v35
  %1773 = vmatprep.subr.mxu0 0.0
  %1774 = vmatpush1.msra.mxu0 0.0
  %1775 = vmatprep.subr.mxu0 0.0
  %1776 = vmatpush1.msra.mxu0 0.0
  %1777 = vmatprep.subr.mxu0 0.0
  %1778 = vmatpush1.msra.mxu0 0.0
  %1779 = vmatprep.subr.mxu0 0.0
  %1780 = vmatpush1.msra.mxu0 0.0
  %1781 = vmatprep.subr.mxu0 0.0
  %1782 = vmatpush1.msra.mxu0 0.0
  %1783 = vmatprep.subr.mxu0 0.0
  %1784 = vmatpush1.msra.mxu0 0.0
  %1785 = vmatprep.subr.mxu0 0.0
  %1786 = vmatpush1.msra.mxu0 0.0
  %1787 = vmatprep.subr.mxu0 0.0
  %1788 = vmatpush1.msra.mxu0 0.0
  %1789 = vmatprep.subr.mxu0 0.0
  %1790 = vmatpush1.msra.mxu0 0.0
  %1791 = vmatprep.subr.mxu0 0.0
  %1792 = vmatpush1.msra.mxu0 0.0
  %1793 = vmatprep.subr.mxu0 0.0
  %1794 = vmatpush1.msra.mxu0 0.0
  %1795 = vmatprep.subr.mxu0 0.0
  %1796 = vmatpush1.msra.mxu0 0.0
  %1797 = vmatprep.subr.mxu0 0.0
  %1798 = vmatpush1.msra.mxu0 0.0
  %1799 = vmatprep.subr.mxu0 0.0
  %1800 = vmatpush1.msra.mxu0 0.0
  %1801 = vmatprep.subr.mxu0 0.0
  %1802 = vmatpush1.msra.mxu0 0.0
  %1803 = vmatprep.subr.mxu0 0.0
  %1804 = vmatpush1.msra.mxu0 0.0
  %1805 = vmatprep.mubr.f32.mxu0 0.0
  %1806 = vmatmul.mubr.f32.gmra.mrb[0].mxu0 %v1740
  %v1807 = vpop.f32.mrb[0].mxu0
  %v1808 = vadd.f32 0.0, %v1807
  %v1809 = vpop.f32.mrb[0].mxu0
  %1810 = vdwg.mxu0
  %v1811 = vsub.f32 %v1740, %v1808
  %v1812 = vmul.f32 %v1811, %v1811
  %1813 = vmatprep.subr.mxu0 0.0
  %1814 = vmatpush1.msra.mxu0 %v20
  %1815 = vmatprep.subr.mxu0 0.0
  %1816 = vmatpush1.msra.mxu0 %v21
  %1817 = vmatprep.subr.mxu0 0.0
  %1818 = vmatpush1.msra.mxu0 %v22
  %1819 = vmatprep.subr.mxu0 0.0
  %1820 = vmatpush1.msra.mxu0 %v23
  %1821 = vmatprep.subr.mxu0 0.0
  %1822 = vmatpush1.msra.mxu0 %v24
  %1823 = vmatprep.subr.mxu0 0.0
  %1824 = vmatpush1.msra.mxu0 %v25
  %1825 = vmatprep.subr.mxu0 0.0
  %1826 = vmatpush1.msra.mxu0 %v26
  %1827 = vmatprep.subr.mxu0 0.0
  %1828 = vmatpush1.msra.mxu0 %v27
  %1829 = vmatprep.subr.mxu0 0.0
  %1830 = vmatpush1.msra.mxu0 %v28
  %1831 = vmatprep.subr.mxu0 0.0
  %1832 = vmatpush1.msra.mxu0 %v29
  %1833 = vmatprep.subr.mxu0 0.0
  %1834 = vmatpush1.msra.mxu0 %v30
  %1835 = vmatprep.subr.mxu0 0.0
  %1836 = vmatpush1.msra.mxu0 %v31
  %1837 = vmatprep.subr.mxu0 0.0
  %1838 = vmatpush1.msra.mxu0 %v32
  %1839 = vmatprep.subr.mxu0 0.0
  %1840 = vmatpush1.msra.mxu0 %v33
  %1841 = vmatprep.subr.mxu0 0.0
  %1842 = vmatpush1.msra.mxu0 %v34
  %1843 = vmatprep.subr.mxu0 0.0
  %1844 = vmatpush1.msra.mxu0 %v35
  %1845 = vmatprep.subr.mxu0 0.0
  %1846 = vmatpush1.msra.mxu0 0.0
  %1847 = vmatprep.subr.mxu0 0.0
  %1848 = vmatpush1.msra.mxu0 0.0
  %1849 = vmatprep.subr.mxu0 0.0
  %1850 = vmatpush1.msra.mxu0 0.0
  %1851 = vmatprep.subr.mxu0 0.0
  %1852 = vmatpush1.msra.mxu0 0.0
  %1853 = vmatprep.subr.mxu0 0.0
  %1854 = vmatpush1.msra.mxu0 0.0
  %1855 = vmatprep.subr.mxu0 0.0
  %1856 = vmatpush1.msra.mxu0 0.0
  %1857 = vmatprep.subr.mxu0 0.0
  %1858 = vmatpush1.msra.mxu0 0.0
  %1859 = vmatprep.subr.mxu0 0.0
  %1860 = vmatpush1.msra.mxu0 0.0
  %1861 = vmatprep.subr.mxu0 0.0
  %1862 = vmatpush1.msra.mxu0 0.0
  %1863 = vmatprep.subr.mxu0 0.0
  %1864 = vmatpush1.msra.mxu0 0.0
  %1865 = vmatprep.subr.mxu0 0.0
  %1866 = vmatpush1.msra.mxu0 0.0
  %1867 = vmatprep.subr.mxu0 0.0
  %1868 = vmatpush1.msra.mxu0 0.0
  %1869 = vmatprep.subr.mxu0 0.0
  %1870 = vmatpush1.msra.mxu0 0.0
  %1871 = vmatprep.subr.mxu0 0.0
  %1872 = vmatpush1.msra.mxu0 0.0
  %1873 = vmatprep.subr.mxu0 0.0
  %1874 = vmatpush1.msra.mxu0 0.0
  %1875 = vmatprep.subr.mxu0 0.0
  %1876 = vmatpush1.msra.mxu0 0.0
  %1877 = vmatprep.mubr.f32.mxu0 0.0
  %1878 = vmatmul.mubr.f32.gmra.mrb[0].mxu0 %v1812
  %v1879 = vpop.f32.mrb[0].mxu0
  %v1880 = vadd.f32 1e-05, %v1879
  %v1881 = vpop.f32.mrb[0].mxu0
  %1882 = vdwg.mxu0
  %v1883 = vrsqrt.pop %v1880
  %v1884 = vmul.f32 %v1811, %v1883
  %v1885 = vld [vmem:[%s4 + $0x423] ss:$0 sm:$0xff]
  %v1886 = vmul.f32 %v1884, %v1885
  %v1887 = vld [vmem:[%s4 + $0x424] ss:$0 sm:$0xff]
  %v1888 = vadd.f32 %v1886, %v1887
  %1889 = vmatprep.subr.mxu0 0.0
  %1890 = vmatpush1.msra.mxu0 %v20
  %1891 = vmatprep.subr.mxu0 0.0
  %1892 = vmatpush1.msra.mxu0 %v21
  %1893 = vmatprep.subr.mxu0 0.0
  %1894 = vmatpush1.msra.mxu0 %v22
  %1895 = vmatprep.subr.mxu0 0.0
  %1896 = vmatpush1.msra.mxu0 %v23
  %1897 = vmatprep.subr.mxu0 0.0
  %1898 = vmatpush1.msra.mxu0 %v24
  %1899 = vmatprep.subr.mxu0 0.0
  %1900 = vmatpush1.msra.mxu0 %v25
  %1901 = vmatprep.subr.mxu0 0.0
  %1902 = vmatpush1.msra.mxu0 %v26
  %1903 = vmatprep.subr.mxu0 0.0
  %1904 = vmatpush1.msra.mxu0 %v27
  %1905 = vmatprep.subr.mxu0 0.0
  %1906 = vmatpush1.msra.mxu0 %v28
  %1907 = vmatprep.subr.mxu0 0.0
  %1908 = vmatpush1.msra.mxu0 %v29
  %1909 = vmatprep.subr.mxu0 0.0
  %1910 = vmatpush1.msra.mxu0 %v30
  %1911 = vmatprep.subr.mxu0 0.0
  %1912 = vmatpush1.msra.mxu0 %v31
  %1913 = vmatprep.subr.mxu0 0.0
  %1914 = vmatpush1.msra.mxu0 %v32
  %1915 = vmatprep.subr.mxu0 0.0
  %1916 = vmatpush1.msra.mxu0 %v33
  %1917 = vmatprep.subr.mxu0 0.0
  %1918 = vmatpush1.msra.mxu0 %v34
  %1919 = vmatprep.subr.mxu0 0.0
  %1920 = vmatpush1.msra.mxu0 %v35
  %1921 = vmatprep.subr.mxu0 0.0
  %1922 = vmatpush1.msra.mxu0 0.0
  %1923 = vmatprep.subr.mxu0 0.0
  %1924 = vmatpush1.msra.mxu0 0.0
  %1925 = vmatprep.subr.mxu0 0.0
  %1926 = vmatpush1.msra.mxu0 0.0
  %1927 = vmatprep.subr.mxu0 0.0
  %1928 = vmatpush1.msra.mxu0 0.0
  %1929 = vmatprep.subr.mxu0 0.0
  %1930 = vmatpush1.msra.mxu0 0.0
  %1931 = vmatprep.subr.mxu0 0.0
  %1932 = vmatpush1.msra.mxu0 0.0
  %1933 = vmatprep.subr.mxu0 0.0
  %1934 = vmatpush1.msra.mxu0 0.0
  %1935 = vmatprep.subr.mxu0 0.0
  %1936 = vmatpush1.msra.mxu0 0.0
  %1937 = vmatprep.subr.mxu0 0.0
  %1938 = vmatpush1.msra.mxu0 0.0
  %1939 = vmatprep.subr.mxu0 0.0
  %1940 = vmatpush1.msra.mxu0 0.0
  %1941 = vmatprep.subr.mxu0 0.0
  %1942 = vmatpush1.msra.mxu0 0.0
  %1943 = vmatprep.subr.mxu0 0.0
  %1944 = vmatpush1.msra.mxu0 0.0
  %1945 = vmatprep.subr.mxu0 0.0
  %1946 = vmatpush1.msra.mxu0 0.0
  %1947 = vmatprep.subr.mxu0 0.0
  %1948 = vmatpush1.msra.mxu0 0.0
  %1949 = vmatprep.subr.mxu0 0.0
  %1950 = vmatpush1.msra.mxu0 0.0
  %1951 = vmatprep.subr.mxu0 0.0
  %1952 = vmatpush1.msra.mxu0 0.0
  %1953 = vmatprep.mubr.f32.mxu0 0.0
  %1954 = vmatmul.mubr.f32.gmra.mrb[0].mxu0 %v1888
  %v1955 = vpop.f32.mrb[0].mxu0
  %v1956 = vadd.f32 0.0, %v1955
  %v1957 = vpop.f32.mrb[0].mxu0
  %1958 = vdwg.mxu0
  %v1959 = vsub.f32 %v1888, %v1956
  %v1960 = vmul.f32 %v1959, %v1959
  %1961 = vmatprep.subr.mxu0 0.0
  %1962 = vmatpush1.msra.mxu0 %v20
  %1963 = vmatprep.subr.mxu0 0.0
  %1964 = vmatpush1.msra.mxu0 %v21
  %1965 = vmatprep.subr.mxu0 0.0
  %1966 = vmatpush1.msra.mxu0 %v22
  %1967 = vmatprep.subr.mxu0 0.0
  %1968 = vmatpush1.msra.mxu0 %v23
  %1969 = vmatprep.subr.mxu0 0.0
  %1970 = vmatpush1.msra.mxu0 %v24
  %1971 = vmatprep.subr.mxu0 0.0
  %1972 = vmatpush1.msra.mxu0 %v25
  %1973 = vmatprep.subr.mxu0 0.0
  %1974 = vmatpush1.msra.mxu0 %v26
  %1975 = vmatprep.subr.mxu0 0.0
  %1976 = vmatpush1.msra.mxu0 %v27
  %1977 = vmatprep.subr.mxu0 0.0
  %1978 = vmatpush1.msra.mxu0 %v28
  %1979 = vmatprep.subr.mxu0 0.0
  %1980 = vmatpush1.msra.mxu0 %v29
  %1981 = vmatprep.subr.mxu0 0.0
  %1982 = vmatpush1.msra.mxu0 %v30
  %1983 = vmatprep.subr.mxu0 0.0
  %1984 = vmatpush1.msra.mxu0 %v31
  %1985 = vmatprep.subr.mxu0 0.0
  %1986 = vmatpush1.msra.mxu0 %v32
  %1987 = vmatprep.subr.mxu0 0.0
  %1988 = vmatpush1.msra.mxu0 %v33
  %1989 = vmatprep.subr.mxu0 0.0
  %1990 = vmatpush1.msra.mxu0 %v34
  %1991 = vmatprep.subr.mxu0 0.0
  %1992 = vmatpush1.msra.mxu0 %v35
  %1993 = vmatprep.subr.mxu0 0.0
  %1994 = vmatpush1.msra.mxu0 0.0
  %1995 = vmatprep.subr.mxu0 0.0
  %1996 = vmatpush1.msra.mxu0 0.0
  %1997 = vmatprep.subr.mxu0 0.0
  %1998 = vmatpush1.msra.mxu0 0.0
  %1999 = vmatprep.subr.mxu0 0.0
  %2000 = vmatpush1.msra.mxu0 0.0
  %2001 = vmatprep.subr.mxu0 0.0
  %2002 = vmatpush1.msra.mxu0 0.0
  %2003 = vmatprep.subr.mxu0 0.0
  %2004 = vmatpush1.msra.mxu0 0.0
  %2005 = vmatprep.subr.mxu0 0.0
  %2006 = vmatpush1.msra.mxu0 0.0
  %2007 = vmatprep.subr.mxu0 0.0
  %2008 = vmatpush1.msra.mxu0 0.0
  %2009 = vmatprep.subr.mxu0 0.0
  %2010 = vmatpush1.msra.mxu0 0.0
  %2011 = vmatprep.subr.mxu0 0.0
  %2012 = vmatpush1.msra.mxu0 0.0
  %2013 = vmatprep.subr.mxu0 0.0
  %2014 = vmatpush1.msra.mxu0 0.0
  %2015 = vmatprep.subr.mxu0 0.0
  %2016 = vmatpush1.msra.mxu0 0.0
  %2017 = vmatprep.subr.mxu0 0.0
  %2018 = vmatpush1.msra.mxu0 0.0
  %2019 = vmatprep.subr.mxu0 0.0
  %2020 = vmatpush1.msra.mxu0 0.0
  %2021 = vmatprep.subr.mxu0 0.0
  %2022 = vmatpush1.msra.mxu0 0.0
  %2023 = vmatprep.subr.mxu0 0.0
  %2024 = vmatpush1.msra.mxu0 0.0
  %2025 = vmatprep.mubr.f32.mxu0 0.0
  %2026 = vmatmul.mubr.f32.gmra.mrb[0].mxu0 %v1960
  %v2027 = vpop.f32.mrb[0].mxu0
  %v2028 = vadd.f32 1e-05, %v2027
  %v2029 = vpop.f32.mrb[0].mxu0
  %2030 = vdwg.mxu0
  %v2031 = vrsqrt.pop %v2028
  %v2032 = vmul.f32 %v1959, %v2031
  %v2033 = vld [vmem:[%s4 + $0x425] ss:$0 sm:$0xff]
  %v2034 = vmul.f32 %v2032, %v2033
  %v2035 = vld [vmem:[%s4 + $0x426] ss:$0 sm:$0xff]
  %v2036 = vadd.f32 %v2034, %v2035
  %v2037 = vld [vmem:[%s4 + $0x200] sm:$0xff]
  %v2038 = vld [vmem:[%s4 + $0x208] sm:$0xff]
  %v2039 = vld [vmem:[%s4 + $0x210] sm:$0xff]
  %v2040 = vld [vmem:[%s4 + $0x218] sm:$0xff]
  %v2041 = vld [vmem:[%s4 + $0x220] sm:$0xff]
  %v2042 = vld [vmem:[%s4 + $0x228] sm:$0xff]
  %v2043 = vld [vmem:[%s4 + $0x230] sm:$0xff]
  %v2044 = vld [vmem:[%s4 + $0x238] sm:$0xff]
  %v2045 = vld [vmem:[%s4 + $0x240] sm:$0xff]
  %v2046 = vld [vmem:[%s4 + $0x248] sm:$0xff]
  %v2047 = vld [vmem:[%s4 + $0x250] sm:$0xff]
  %v2048 = vld [vmem:[%s4 + $0x258] sm:$0xff]
  %v2049 = vld [vmem:[%s4 + $0x260] sm:$0xff]
  %v2050 = vld [vmem:[%s4 + $0x268] sm:$0xff]
  %v2051 = vld [vmem:[%s4 + $0x270] sm:$0xff]
  %v2052 = vld [vmem:[%s4 + $0x278] sm:$0xff]
  %v2053 = vld [vmem:[%s4 + $0x280] sm:$0xff]
  %v2054 = vld [vmem:[%s4 + $0x288] sm:$0xff]
  %v2055 = vld [vmem:[%s4 + $0x290] sm:$0xff]
  %v2056 = vld [vmem:[%s4 + $0x298] sm:$0xff]
  %v2057 = vld [vmem:[%s4 + $0x2a0] sm:$0xff]
  %v2058 = vld [vmem:[%s4 + $0x2a8] sm:$0xff]
  %v2059 = vld [vmem:[%s4 + $0x2b0] sm:$0xff]
  %v2060 = vld [vmem:[%s4 + $0x2b8] sm:$0xff]
  %v2061 = vld [vmem:[%s4 + $0x2c0] sm:$0xff]
  %v2062 = vld [vmem:[%s4 + $0x2c8] sm:$0xff]
  %v2063 = vld [vmem:[%s4 + $0x2d0] sm:$0xff]
  %v2064 = vld [vmem:[%s4 + $0x2d8] sm:$0xff]
  %v2065 = vld [vmem:[%s4 + $0x2e0] sm:$0xff]
  %v2066 = vld [vmem:[%s4 + $0x2e8] sm:$0xff]
  %v2067 = vld [vmem:[%s4 + $0x2f0] sm:$0xff]
  %v2068 = vld [vmem:[%s4 + $0x2f8] sm:$0xff]
  %v2069 = vld [vmem:[%s4 + $0x300] sm:$0xff]
  %v2070 = vld [vmem:[%s4 + $0x308] sm:$0xff]
  %v2071 = vld [vmem:[%s4 + $0x310] sm:$0xff]
  %v2072 = vld [vmem:[%s4 + $0x318] sm:$0xff]
  %v2073 = vld [vmem:[%s4 + $0x320] sm:$0xff]
  %v2074 = vld [vmem:[%s4 + $0x328] sm:$0xff]
  %v2075 = vld [vmem:[%s4 + $0x330] sm:$0xff]
  %v2076 = vld [vmem:[%s4 + $0x338] sm:$0xff]
  %v2077 = vld [vmem:[%s4 + $0x340] sm:$0xff]
  %v2078 = vld [vmem:[%s4 + $0x348] sm:$0xff]
  %v2079 = vld [vmem:[%s4 + $0x350] sm:$0xff]
  %v2080 = vld [vmem:[%s4 + $0x358] sm:$0xff]
  %v2081 = vld [vmem:[%s4 + $0x360] sm:$0xff]
  %v2082 = vld [vmem:[%s4 + $0x368] sm:$0xff]
  %v2083 = vld [vmem:[%s4 + $0x370] sm:$0xff]
  %v2084 = vld [vmem:[%s4 + $0x378] sm:$0xff]
  %v2085 = vld [vmem:[%s4 + $0x380] sm:$0xff]
  %v2086 = vld [vmem:[%s4 + $0x388] sm:$0xff]
  %v2087 = vld [vmem:[%s4 + $0x390] sm:$0xff]
  %v2088 = vld [vmem:[%s4 + $0x398] sm:$0xff]
  %v2089 = vld [vmem:[%s4 + $0x3a0] sm:$0xff]
  %v2090 = vld [vmem:[%s4 + $0x3a8] sm:$0xff]
  %v2091 = vld [vmem:[%s4 + $0x3b0] sm:$0xff]
  %v2092 = vld [vmem:[%s4 + $0x3b8] sm:$0xff]
  %v2093 = vld [vmem:[%s4 + $0x3c0] sm:$0xff]
  %v2094 = vld [vmem:[%s4 + $0x3c8] sm:$0xff]
  %v2095 = vld [vmem:[%s4 + $0x3d0] sm:$0xff]
  %v2096 = vld [vmem:[%s4 + $0x3d8] sm:$0xff]
  %v2097 = vld [vmem:[%s4 + $0x3e0] sm:$0xff]
  %v2098 = vld [vmem:[%s4 + $0x3e8] sm:$0xff]
  %v2099 = vld [vmem:[%s4 + $0x3f0] sm:$0xff]
  %v2100 = vld [vmem:[%s4 + $0x3f8] sm:$0xff]
  %s2101 = scalar_lea.vmem %s4, 1063
  %v2102 = vld [vmem:[%s2101] ss:$8 sm:$0xf]
  %v2104 = vlaneseq
  %v2105 = vshrl.u32 %v2104, 7
  %v2106 = vsub.s32 0, %v2105
  %v2107 = vrot.slane %v2102, %v2106
  %v2108 = vlaneseq
  %v2109 = vshrl.u32 %v2108, 7
  %v2110 = vsub.s32 1, %v2109
  %v2111 = vrot.slane %v2102, %v2110
  %v2112 = vlaneseq
  %v2113 = vshrl.u32 %v2112, 7
  %v2114 = vsub.s32 2, %v2113
  %v2115 = vrot.slane %v2102, %v2114
  %v2116 = vlaneseq
  %v2117 = vshrl.u32 %v2116, 7
  %v2118 = vsub.s32 3, %v2117
  %v2119 = vrot.slane %v2102, %v2118
  %2124 = vmatprep.subr.mxu0 %v2038
  %2125 = vmatpush1.msra.mxu0 %v2037
  %2126 = vmatprep.subr.mxu0 %v2042
  %2127 = vmatpush1.msra.mxu0 %v2041
  %2128 = vmatprep.subr.mxu0 %v2046
  %2129 = vmatpush1.msra.mxu0 %v2045
  %2130 = vmatprep.subr.mxu0 %v2050
  %2131 = vmatpush1.msra.mxu0 %v2049
  %2132 = vmatprep.subr.mxu0 %v2054
  %2133 = vmatpush1.msra.mxu0 %v2053
  %2134 = vmatprep.subr.mxu0 %v2058
  %2135 = vmatpush1.msra.mxu0 %v2057
  %2136 = vmatprep.subr.mxu0 %v2062
  %2137 = vmatpush1.msra.mxu0 %v2061
  %2138 = vmatprep.subr.mxu0 %v2066
  %2139 = vmatpush1.msra.mxu0 %v2065
  %2140 = vmatprep.subr.mxu0 %v2070
  %2141 = vmatpush1.msra.mxu0 %v2069
  %2142 = vmatprep.subr.mxu0 %v2074
  %2143 = vmatpush1.msra.mxu0 %v2073
  %2144 = vmatprep.subr.mxu0 %v2078
  %2145 = vmatpush1.msra.mxu0 %v2077
  %2146 = vmatprep.subr.mxu0 %v2082
  %2147 = vmatpush1.msra.mxu0 %v2081
  %2148 = vmatprep.subr.mxu0 %v2086
  %2149 = vmatpush1.msra.mxu0 %v2085
  %2150 = vmatprep.subr.mxu0 %v2090
  %2151 = vmatpush1.msra.mxu0 %v2089
  %2152 = vmatprep.subr.mxu0 %v2094
  %2153 = vmatpush1.msra.mxu0 %v2093
  %2154 = vmatprep.subr.mxu0 %v2098
  %2155 = vmatpush1.msra.mxu0 %v2097
  %2156 = vmatprep.subr.mxu0 0.0
  %2157 = vmatpush1.msra.mxu0 0.0
  %2158 = vmatprep.subr.mxu0 0.0
  %2159 = vmatpush1.msra.mxu0 0.0
  %2160 = vmatprep.subr.mxu0 0.0
  %2161 = vmatpush1.msra.mxu0 0.0
  %2162 = vmatprep.subr.mxu0 0.0
  %2163 = vmatpush1.msra.mxu0 0.0
  %2164 = vmatprep.subr.mxu0 0.0
  %2165 = vmatpush1.msra.mxu0 0.0
  %2166 = vmatprep.subr.mxu0 0.0
  %2167 = vmatpush1.msra.mxu0 0.0
  %2168 = vmatprep.subr.mxu0 0.0
  %2169 = vmatpush1.msra.mxu0 0.0
  %2170 = vmatprep.subr.mxu0 0.0
  %2171 = vmatpush1.msra.mxu0 0.0
  %2172 = vmatprep.subr.mxu0 0.0
  %2173 = vmatpush1.msra.mxu0 0.0
  %2174 = vmatprep.subr.mxu0 0.0
  %2175 = vmatpush1.msra.mxu0 0.0
  %2176 = vmatprep.subr.mxu0 0.0
  %2177 = vmatpush1.msra.mxu0 0.0
  %2178 = vmatprep.subr.mxu0 0.0
  %2179 = vmatpush1.msra.mxu0 0.0
  %2180 = vmatprep.subr.mxu0 0.0
  %2181 = vmatpush1.msra.mxu0 0.0
  %2182 = vmatprep.subr.mxu0 0.0
  %2183 = vmatpush1.msra.mxu0 0.0
  %2184 = vmatprep.subr.mxu0 0.0
  %2185 = vmatpush1.msra.mxu0 0.0
  %2186 = vmatprep.subr.mxu0 0.0
  %2187 = vmatpush1.msra.mxu0 0.0
  %2188 = vmatprep.mubr.f32.mxu0 0.0
  %2189 = vmatmul.mubr.f32.gmra.mrb[0].mxu0 %v2036
  %v2190 = vpop.f32.mrb[0].mxu0
  %v2191 = vadd.f32 %v2107, %v2190
  %v2192 = vpop.f32.mrb[0].mxu0
  %v2193 = vadd.f32 %v2111, %v2192
  %2194 = vdwg.mxu0
  %2195 = vmatprep.subr.mxu0 %v2040
  %2196 = vmatpush1.msra.mxu0 %v2039
  %2197 = vmatprep.subr.mxu0 %v2044
  %2198 = vmatpush1.msra.mxu0 %v2043
  %2199 = vmatprep.subr.mxu0 %v2048
  %2200 = vmatpush1.msra.mxu0 %v2047
  %2201 = vmatprep.subr.mxu0 %v2052
  %2202 = vmatpush1.msra.mxu0 %v2051
  %2203 = vmatprep.subr.mxu0 %v2056
  %2204 = vmatpush1.msra.mxu0 %v2055
  %2205 = vmatprep.subr.mxu0 %v2060
  %2206 = vmatpush1.msra.mxu0 %v2059
  %2207 = vmatprep.subr.mxu0 %v2064
  %2208 = vmatpush1.msra.mxu0 %v2063
  %2209 = vmatprep.subr.mxu0 %v2068
  %2210 = vmatpush1.msra.mxu0 %v2067
  %2211 = vmatprep.subr.mxu0 %v2072
  %2212 = vmatpush1.msra.mxu0 %v2071
  %2213 = vmatprep.subr.mxu0 %v2076
  %2214 = vmatpush1.msra.mxu0 %v2075
  %2215 = vmatprep.subr.mxu0 %v2080
  %2216 = vmatpush1.msra.mxu0 %v2079
  %2217 = vmatprep.subr.mxu0 %v2084
  %2218 = vmatpush1.msra.mxu0 %v2083
  %2219 = vmatprep.subr.mxu0 %v2088
  %2220 = vmatpush1.msra.mxu0 %v2087
  %2221 = vmatprep.subr.mxu0 %v2092
  %2222 = vmatpush1.msra.mxu0 %v2091
  %2223 = vmatprep.subr.mxu0 %v2096
  %2224 = vmatpush1.msra.mxu0 %v2095
  %2225 = vmatprep.subr.mxu0 %v2100
  %2226 = vmatpush1.msra.mxu0 %v2099
  %2227 = vmatprep.subr.mxu0 0.0
  %2228 = vmatpush1.msra.mxu0 0.0
  %2229 = vmatprep.subr.mxu0 0.0
  %2230 = vmatpush1.msra.mxu0 0.0
  %2231 = vmatprep.subr.mxu0 0.0
  %2232 = vmatpush1.msra.mxu0 0.0
  %2233 = vmatprep.subr.mxu0 0.0
  %2234 = vmatpush1.msra.mxu0 0.0
  %2235 = vmatprep.subr.mxu0 0.0
  %2236 = vmatpush1.msra.mxu0 0.0
  %2237 = vmatprep.subr.mxu0 0.0
  %2238 = vmatpush1.msra.mxu0 0.0
  %2239 = vmatprep.subr.mxu0 0.0
  %2240 = vmatpush1.msra.mxu0 0.0
  %2241 = vmatprep.subr.mxu0 0.0
  %2242 = vmatpush1.msra.mxu0 0.0
  %2243 = vmatprep.subr.mxu0 0.0
  %2244 = vmatpush1.msra.mxu0 0.0
  %2245 = vmatprep.subr.mxu0 0.0
  %2246 = vmatpush1.msra.mxu0 0.0
  %2247 = vmatprep.subr.mxu0 0.0
  %2248 = vmatpush1.msra.mxu0 0.0
  %2249 = vmatprep.subr.mxu0 0.0
  %2250 = vmatpush1.msra.mxu0 0.0
  %2251 = vmatprep.subr.mxu0 0.0
  %2252 = vmatpush1.msra.mxu0 0.0
  %2253 = vmatprep.subr.mxu0 0.0
  %2254 = vmatpush1.msra.mxu0 0.0
  %2255 = vmatprep.subr.mxu0 0.0
  %2256 = vmatpush1.msra.mxu0 0.0
  %2257 = vmatprep.subr.mxu0 0.0
  %2258 = vmatpush1.msra.mxu0 0.0
  %2259 = vmatprep.mubr.f32.mxu0 0.0
  %2260 = vmatmul.mubr.f32.gmra.mrb[0].mxu0 %v2036
  %v2261 = vpop.f32.mrb[0].mxu0
  %v2262 = vadd.f32 %v2115, %v2261
  %v2263 = vpop.f32.mrb[0].mxu0
  %v2264 = vadd.f32 %v2119, %v2263
  %2265 = vdwg.mxu0
  %v2270 = vcombine.low %v2191, %v2193
  %v2271 = vcombine.low %v2262, %v2264
  %v2273 = vunpack.c.l.s4 1966171168
  %v2274 = vunpack.c.0.s8 %v2273
  %v2275 = vlaneseq
  %v2276 = vshrl.u32 %v2275, 7
  %v2277 = vsub.s32 %v2274, %v2276
  %v2278 = vrot.slane %v2270, %v2277
  %v2280 = vunpack.c.l.s4 1966171168
  %v2281 = vunpack.c.0.s8 %v2280
  %v2282 = vlaneseq
  %v2283 = vshrl.u32 %v2282, 7
  %v2284 = vsub.s32 %v2281, %v2283
  %v2285 = vrot.slane %v2271, %v2284
  %v2286 = vcombine.low %v2278, %v2285
  %v2288 = vunpack.c.l.s4 1966171168
  %v2289 = vunpack.c.0.s8 %v2288
  %v2290 = vlaneseq
  %v2291 = vshrl.u32 %v2290, 7
  %v2292 = vsub.s32 %v2289, %v2291
  %v2293 = vrot.slane %v2286, %v2292
  %v2295 = vlaneseq
  %vm2296 = vcmp.ge.s32.totalorder %v2295, 0
  %vm2297 = vcmp.lt.s32.totalorder %v2295, 512
  %vm2298 = vmand %vm2296, %vm2297
  %2299 = vst.msk [vmem:[%s5] sm:$0xf] %vm2298, %v2293
  // Predicated region
  $region22: #{btc_transformer_forward.1} parent=0 // pred_check
    _
  $region23: #{btc_transformer_forward.1} parent=0 // pred_check_branch
    %2301 = sbr.rel (0) target = $region25
  $region24: #{btc_transformer_forward.1} parent=0 // pred_region
    _
  $region25: #{btc_transformer_forward.1} parent=0 // pred_fallthru
    _
  // Predicated region
  $region26: #{btc_transformer_forward.1} parent=0 // pred_check
    _
  $region27: #{btc_transformer_forward.1} parent=0 // pred_check_branch
    %2303 = sbr.rel (0) target = $region29
  $region28: #{btc_transformer_forward.1} parent=0 // pred_region
    _
  $region29: #{btc_transformer_forward.1} parent=0 // pred_fallthru
    _

</llo_original>
